<compile_context>
chip_gen: v6e
topology: v6e:2x2x1
jax: 0.10.0
libtpu: 0.0.40
codegen_flags: <defaults>
</compile_context>

<pallas_src>
import functools

import jax
import jax.numpy as jnp
from jax import lax
from jax.experimental import pallas as pl
from jax.experimental.pallas import tpu as pltpu

PAD = 3      # conbr_block hard-codes padding=3
EPS = 1e-5   # nn.InstanceNorm1d default eps


# --------------------------- in-kernel helpers ---------------------------

def _conv_mxu(xfull, w, bias, masks, *, K, dil, fused):
    """Dilated Conv1d over the lane-packed (C, B*Lp) slab.

    masks[k] is the (1, B*Lp) validity mask for tap k (None for the zero-shift
    tap); it zeroes everything that would cross a sample / padding boundary, so
    a plain lane roll implements the per-sample zero-padded convolution.
    """
    pieces = []
    for k in range(K):
        s = k * dil - PAD
        p = xfull if s == 0 else jnp.roll(xfull, -s, axis=1)   # p[:, t] = x[:, t+s]
        if masks[k] is not None:
            p = jnp.where(masks[k], p, 0.0)
        pieces.append(p)

    if fused:
        # One MXU matmul: (Cout, K*C) @ (K*C, B*Lp); operands in bf16, f32 accum.
        col = jnp.concatenate(pieces, axis=0).astype(w.dtype)
        y = jnp.dot(w, col, preferred_element_type=jnp.float32)
    else:
        # Large K*C: accumulate K per-tap matmuls, no im2col intermediate.
        y = None
        for k in range(K):
            yk = jnp.dot(w[k], pieces[k].astype(w.dtype),
                         preferred_element_type=jnp.float32)
            y = yk if y is None else y + yk
    return y + bias                                             # (Cout, B*Lp) f32


def _norm_prelu_pool(y, alpha, vmask, *, B, Lp, L):
    """Per-sample InstanceNorm1d + PReLU with fused scale/shift (no MXU).

    Stats are XLU lane-reductions over each sample's Lp-wide segment; the
    normalization is applied as yn = y*scale + shift (one FMA per element).
    Also returns the per-sample mean of the PReLU output (SE pooling), reusing
    the same loop.
    """
    inv_l = 1.0 / L
    segs, pools = [], []
    for b in range(B):
        sl = slice(b * Lp, (b + 1) * Lp)
        yb = y[:, sl]                                           # (Cout, Lp)
        yv = jnp.where(vmask, yb, 0.0) if vmask is not None else yb
        s1 = jnp.sum(yv, axis=1, keepdims=True)                 # (Cout, 1)
        s2 = jnp.sum(yv * yv, axis=1, keepdims=True)            # (Cout, 1)
        mean = s1 * inv_l
        var = jnp.maximum(s2 * inv_l - mean * mean, 0.0)        # one-pass, clamped
        scale = lax.rsqrt(var + EPS)
        shift = -mean * scale
        yn = yb * scale + shift                                 # VPU lane broadcast
        ob = jnp.where(yn > 0, yn, alpha * yn)                  # PReLU
        if vmask is not None:
            ob = jnp.where(vmask, ob, 0.0)                      # keep padded tail zero
        segs.append(ob)
        pools.append(jnp.sum(ob, axis=1, keepdims=True) * inv_l)
    out = segs[0] if B == 1 else jnp.concatenate(segs, axis=1)      # (Cout, B*Lp)
    pooled = pools[0] if B == 1 else jnp.concatenate(pools, axis=1)  # (Cout, B)
    return out, pooled


def re_block_kernel(prelu_ref, pos_ref, x_ref,
                    w1_ref, b1_ref, w2_ref, b2_ref,
                    wse1_ref, bse1_ref, wse2_ref, bse2_ref,
                    o_ref, *, K, dil, L, Lp, B, fused):
    a1 = prelu_ref[0]
    a2 = prelu_ref[1]
    a3 = prelu_ref[2]
    tpos = pos_ref[...]                                   # (1, B*Lp) within-sample pos

    # Hoisted per-tap validity masks: computed once, reused by both convolutions.
    masks = []
    for k in range(K):
        s = k * dil - PAD
        if s == 0:
            masks.append(None)
        else:
            src = tpos + s
            masks.append((src >= 0) & (src < L))
    vmask = (tpos[:, :Lp] < L) if Lp != L else None       # (1, Lp) valid-time mask

    x = x_ref[...].astype(jnp.float32)                     # (Cin, B*Lp)

    # ---- cbr1 / cbr2: Conv1d -> InstanceNorm1d -> PReLU ----
    y1 = _conv_mxu(x, w1_ref[...], b1_ref[...], masks, K=K, dil=dil, fused=fused)
    y1, _ = _norm_prelu_pool(y1, a1, vmask, B=B, Lp=Lp, L=L)

    y2 = _conv_mxu(y1, w2_ref[...], b2_ref[...], masks, K=K, dil=dil, fused=fused)
    y2, pooled = _norm_prelu_pool(y2, a2, vmask, B=B, Lp=Lp, L=L)

    # ---- se_block: avg-pool(L) -> 1x1 conv -> PReLU -> 1x1 conv -> sigmoid ----
    h = jnp.dot(wse1_ref[...], pooled, preferred_element_type=jnp.float32) + bse1_ref[...]
    h = jnp.where(h > 0, h, a3 * h)                        # (C//8, B)
    g = jnp.dot(wse2_ref[...], h, preferred_element_type=jnp.float32) + bse2_ref[...]
    g = 1.0 / (1.0 + jnp.exp(-g))                          # sigmoid, (Cout, B)

    # ---- SE additive gate (VPU lane broadcast) + outer residual add ----
    segs = []
    for b in range(B):
        sl = slice(b * Lp, (b + 1) * Lp)
        segs.append(x[:, sl] + y2[:, sl] + g[:, b:b + 1])
    out = segs[0] if B == 1 else jnp.concatenate(segs, axis=1)
    o_ref[...] = out.astype(o_ref.dtype)


# ------------------------------ wrapper ------------------------------

def _vmem_bytes(Cin, Cout, C8, K, B, Lp, fused, conv_bytes):
    lanes = B * Lp
    io = 2 * (Cin + Cout) * lanes * 4                       # double-buffered x/out tiles
    wconv = (Cout * K * Cin + Cout * K * Cout) * conv_bytes
    wse = (C8 * Cout + Cout * C8 + 2 * Cout + C8) * 4
    consts = 2 * (wconv + wse + lanes * 4)                  # grid-invariant inputs (x2 buf)
    col = (K if fused else 1) * max(Cin, Cout) * lanes * conv_bytes
    live = col + 4 * Cout * lanes * 4                       # im2col + live f32 slabs
    return io + consts + live


def _pick_batch_tile(N, Lp, Cin, Cout, C8, K, fused, conv_bytes,
                     target_lanes=1024, budget=40 << 20):
    """Samples per grid step.  Targets ~512-2048 lane-dense lanes per step, keeps
    >=2 grid steps when the batch allows it (v7x dual TensorCore), and stays inside
    a VMEM budget that fits every generation (v7x: 64 MiB physical)."""
    B = max(1, min(N, target_lanes // Lp))
    if B >= N and N >= 2:
        B = (N + 1) // 2
    while B > 1 and _vmem_bytes(Cin, Cout, C8, K, B, Lp, fused, conv_bytes) > budget:
        B -= 1
    G = -(-N // B)
    return B, G, G * B


def _const_spec(shape):
    zeros = (0,) * len(shape)
    return pl.BlockSpec(shape, lambda n: zeros)


def re_block_forward(x, params, *, kernel_size, dilation, conv_dtype=jnp.bfloat16):
    N, Cin, L = x.shape
    (w1, b1, a1, w2, b2, a2, wse1, bse1, wse2, bse2, a3) = params
    Cout = w1.shape[0]
    C8 = wse1.shape[0]
    K = kernel_size
    assert L + 2 * PAD - dilation * (K - 1) == L, "residual add needs same length"
    assert Cin == Cout, "residual add needs matching channel count"

    Lp = ((L + 127) // 128) * 128                         # lane-dense per-sample width
    fused = (K * max(Cin, Cout)) <= 256                   # single im2col matmul vs per-tap
    conv_bytes = jnp.dtype(conv_dtype).itemsize
    B, G, Np = _pick_batch_tile(N, Lp, Cin, Cout, C8, K, fused, conv_bytes)
    BLp = B * Lp

    est = _vmem_bytes(Cin, Cout, C8, K, B, Lp, fused, conv_bytes)
    vmem_limit = int(max(est + (4 << 20), 32 << 20))

    # ---- layout glue (pure data movement, outside the kernel) ----
    xt = jnp.transpose(x, (1, 0, 2))                      # (C, N, L)
    if Lp != L or Np != N:
        xt = jnp.pad(xt, ((0, 0), (0, Np - N), (0, Lp - L)))
    x2 = xt.reshape(Cin, Np * Lp)                         # lane-packed (C, Np*Lp)

    if fused:
        w1_k = jnp.transpose(w1, (0, 2, 1)).reshape(Cout, K * Cin).astype(conv_dtype)
        w2_k = jnp.transpose(w2, (0, 2, 1)).reshape(Cout, K * Cout).astype(conv_dtype)
    else:
        w1_k = jnp.transpose(w1, (2, 0, 1)).astype(conv_dtype)   # (K, Cout, Cin)
        w2_k = jnp.transpose(w2, (2, 0, 1)).astype(conv_dtype)
    b1_k = b1.reshape(Cout, 1).astype(jnp.float32)
    b2_k = b2.reshape(Cout, 1).astype(jnp.float32)
    wse1_k = wse1.reshape(C8, Cout).astype(jnp.float32)
    bse1_k = bse1.reshape(C8, 1).astype(jnp.float32)
    wse2_k = wse2.reshape(Cout, C8).astype(jnp.float32)
    bse2_k = bse2.reshape(Cout, 1).astype(jnp.float32)
    prelu = jnp.stack([a1, a2, a3]).astype(jnp.float32).reshape(3)   # SMEM scalars
    pos2 = jnp.tile(jnp.arange(Lp, dtype=jnp.int32), B).reshape(1, BLp)

    kernel = functools.partial(re_block_kernel, K=K, dil=dilation,
                               L=L, Lp=Lp, B=B, fused=fused)

    out2 = pl.pallas_call(
        kernel,
        out_shape=jax.ShapeDtypeStruct((Cout, Np * Lp), x.dtype),
        grid_spec=pltpu.PrefetchScalarGridSpec(
            num_scalar_prefetch=0,
            grid=(G,),
            in_specs=[
                pl.BlockSpec(memory_space=pltpu.MemorySpace.SMEM),  # PReLU a1/a2/a3
                _const_spec((1, BLp)),                              # within-sample pos
                pl.BlockSpec((Cin, BLp), lambda n: (0, n)),         # x (batch tile)
                _const_spec(w1_k.shape),                            # conv1 weight (bf16)
                _const_spec((Cout, 1)),                             # conv1 bias
                _const_spec(w2_k.shape),                            # conv2 weight (bf16)
                _const_spec((Cout, 1)),                             # conv2 bias
                _const_spec((C8, Cout)),                            # se conv1 weight
                _const_spec((C8, 1)),                               # se conv1 bias
                _const_spec((Cout, C8)),                            # se conv2 weight
                _const_spec((Cout, 1)),                             # se conv2 bias
            ],
            out_specs=pl.BlockSpec((Cout, BLp), lambda n: (0, n)),
        ),
        compiler_params=pltpu.CompilerParams(
            dimension_semantics=("parallel",),     # batch tiles are independent
            vmem_limit_bytes=vmem_limit,           # budget derived from actual shapes
        ),
    )(prelu, pos2, x2, w1_k, b1_k, w2_k, b2_k, wse1_k, bse1_k, wse2_k, bse2_k)

    out = out2.reshape(Cout, Np, Lp)[:, :N, :L]
    return jnp.transpose(out, (1, 0, 2))


# ---------------- pure-JAX reference (mirrors the PyTorch forward) ----------------

def _conv1d_ref(x, w, b, dilation, pad):
    N, Cin, L = x.shape
    Cout, _, K = w.shape
    xp = jnp.pad(x, ((0, 0), (0, 0), (pad, pad)))
    Lout = L + 2 * pad - dilation * (K - 1)
    out = jnp.zeros((N, Cout, Lout), jnp.float32)
    for k in range(K):
        out = out + jnp.einsum('oc,ncl->nol', w[:, :, k],
                               xp[:, :, k * dilation:k * dilation + Lout])
    return out + b[None, :, None]


def _instnorm_prelu_ref(y, a):
    mean = jnp.mean(y, axis=2, keepdims=True)
    var = jnp.mean((y - mean) ** 2, axis=2, keepdims=True)
    yn = (y - mean) / jnp.sqrt(var + EPS)
    return jnp.where(yn > 0, yn, a * yn)


def re_block_ref(x, params, *, kernel_size, dilation):
    (w1, b1, a1, w2, b2, a2, wse1, bse1, wse2, bse2, a3) = params
    y1 = _instnorm_prelu_ref(_conv1d_ref(x, w1, b1, dilation, PAD), a1)
    y2 = _instnorm_prelu_ref(_conv1d_ref(y1, w2, b2, dilation, PAD), a2)
    s = jnp.mean(y2, axis=2, keepdims=True)
    h = jnp.einsum('oc,ncl->nol', wse1[:, :, 0], s) + bse1[None, :, None]
    h = jnp.where(h > 0, h, a3 * h)
    g = jnp.einsum('oc,ncl->nol', wse2[:, :, 0], h) + bse2[None, :, None]
    g = jax.nn.sigmoid(g)
    return x + (y2 + g)


if __name__ == "__main__":
    # Small shapes consistent with the module: re_block(16, 16, kernel_size=7, dilation=1)
    # (padding=3 fixed => dilation*(kernel_size-1) must equal 6 for the residual add).
    N, C, L = 2, 16, 32
    K, dilation = 7, 1

    key = jax.random.PRNGKey(0)
    ks = jax.random.split(key, 9)
    C8 = C // 8
    w1 = 0.1 * jax.random.normal(ks[0], (C, C, K), jnp.float32)
    b1 = 0.1 * jax.random.normal(ks[1], (C,), jnp.float32)
    w2 = 0.1 * jax.random.normal(ks[2], (C, C, K), jnp.float32)
    b2 = 0.1 * jax.random.normal(ks[3], (C,), jnp.float32)
    wse1 = 0.3 * jax.random.normal(ks[4], (C8, C, 1), jnp.float32)
    bse1 = 0.1 * jax.random.normal(ks[5], (C8,), jnp.float32)
    wse2 = 0.3 * jax.random.normal(ks[6], (C, C8, 1), jnp.float32)
    bse2 = 0.1 * jax.random.normal(ks[7], (C,), jnp.float32)
    a1 = jnp.array(0.25, jnp.float32)   # PReLU default init
    a2 = jnp.array(0.25, jnp.float32)
    a3 = jnp.array(0.25, jnp.float32)
    params = (w1, b1, a1, w2, b2, a2, wse1, bse1, wse2, bse2, a3)

    x = jax.random.normal(ks[8], (N, C, L), jnp.float32)

    out = re_block_forward(x, params, kernel_size=K, dilation=dilation)
    out = jax.block_until_ready(out)

    ref = re_block_ref(x, params, kernel_size=K, dilation=dilation)
    assert out.shape == ref.shape == (N, C, L)
    # Tolerance accounts for bf16 conv operands (f32 accumulation + f32 InstanceNorm).
    assert jnp.allclose(out, ref, atol=2e-2, rtol=2e-2), \
        float(jnp.max(jnp.abs(out - ref)))
    print("KERNEL_OK")
</pallas_src>

<mosaic_0001>
module attributes {stable_mosaic.version = 11 : i64} {
  func.func @re_block_kernel(%arg0: i32, %arg1: memref<3xf32, #tpu.memory_space<smem>>, %arg2: memref<1x128xi32, #tpu.memory_space<vmem>>, %arg3: memref<16x128xf32, #tpu.memory_space<vmem>>, %arg4: memref<16x112xbf16, #tpu.memory_space<vmem>>, %arg5: memref<16x1xf32, #tpu.memory_space<vmem>>, %arg6: memref<16x112xbf16, #tpu.memory_space<vmem>>, %arg7: memref<16x1xf32, #tpu.memory_space<vmem>>, %arg8: memref<2x16xf32, #tpu.memory_space<vmem>>, %arg9: memref<2x1xf32, #tpu.memory_space<vmem>>, %arg10: memref<16x2xf32, #tpu.memory_space<vmem>>, %arg11: memref<16x1xf32, #tpu.memory_space<vmem>>, %arg12: memref<16x128xf32, #tpu.memory_space<vmem>>) attributes {dimension_semantics = [#tpu.dimension_semantics<parallel>], iteration_bounds = array<i64: 2>, scalar_prefetch = 0 : i64, scratch_operands = 0 : i64, tpu.core_type = #tpu.core_type<tc>, window_params = [{transform_indices = @transform_0, window_bounds = array<i64: 3>}, {pipeline_mode = #tpu.pipeline_mode<synchronous>, transform_indices = @transform_1, window_bounds = array<i64: 1, 128>}, {transform_indices = @transform_2, window_bounds = array<i64: 16, 128>}, {pipeline_mode = #tpu.pipeline_mode<synchronous>, transform_indices = @transform_3, window_bounds = array<i64: 16, 112>}, {pipeline_mode = #tpu.pipeline_mode<synchronous>, transform_indices = @transform_4, window_bounds = array<i64: 16, 1>}, {pipeline_mode = #tpu.pipeline_mode<synchronous>, transform_indices = @transform_5, window_bounds = array<i64: 16, 112>}, {pipeline_mode = #tpu.pipeline_mode<synchronous>, transform_indices = @transform_6, window_bounds = array<i64: 16, 1>}, {pipeline_mode = #tpu.pipeline_mode<synchronous>, transform_indices = @transform_7, window_bounds = array<i64: 2, 16>}, {pipeline_mode = #tpu.pipeline_mode<synchronous>, transform_indices = @transform_8, window_bounds = array<i64: 2, 1>}, {pipeline_mode = #tpu.pipeline_mode<synchronous>, transform_indices = @transform_9, window_bounds = array<i64: 16, 2>}, {pipeline_mode = #tpu.pipeline_mode<synchronous>, transform_indices = @transform_10, window_bounds = array<i64: 16, 1>}, {transform_indices = @transform_11, window_bounds = array<i64: 16, 128>}]} {
    %c0 = arith.constant 0 : index
    %0 = memref.load %arg1[%c0] : memref<3xf32, #tpu.memory_space<smem>>
    %c1 = arith.constant 1 : index
    %1 = memref.load %arg1[%c1] : memref<3xf32, #tpu.memory_space<smem>>
    %c2 = arith.constant 2 : index
    %2 = memref.load %arg1[%c2] : memref<3xf32, #tpu.memory_space<smem>>
    %c0_0 = arith.constant 0 : index
    %c0_1 = arith.constant 0 : index
    %3 = vector.load %arg2[%c0_0, %c0_1] : memref<1x128xi32, #tpu.memory_space<vmem>>, vector<1x128xi32>
    %c-3_i32 = arith.constant -3 : i32
    %4 = vector.broadcast %c-3_i32 : i32 to vector<1x128xi32>
    %5 = arith.addi %3, %4 : vector<1x128xi32>
    %c0_i32 = arith.constant 0 : i32
    %6 = vector.broadcast %c0_i32 : i32 to vector<1x128xi32>
    %7 = arith.cmpi sge, %5, %6 : vector<1x128xi32>
    %c32_i32 = arith.constant 32 : i32
    %8 = vector.broadcast %c32_i32 : i32 to vector<1x128xi32>
    %9 = arith.cmpi slt, %5, %8 : vector<1x128xi32>
    %10 = arith.andi %7, %9 : vector<1x128xi1>
    %c-2_i32 = arith.constant -2 : i32
    %11 = vector.broadcast %c-2_i32 : i32 to vector<1x128xi32>
    %12 = arith.addi %3, %11 : vector<1x128xi32>
    %c0_i32_2 = arith.constant 0 : i32
    %13 = vector.broadcast %c0_i32_2 : i32 to vector<1x128xi32>
    %14 = arith.cmpi sge, %12, %13 : vector<1x128xi32>
    %c32_i32_3 = arith.constant 32 : i32
    %15 = vector.broadcast %c32_i32_3 : i32 to vector<1x128xi32>
    %16 = arith.cmpi slt, %12, %15 : vector<1x128xi32>
    %17 = arith.andi %14, %16 : vector<1x128xi1>
    %c-1_i32 = arith.constant -1 : i32
    %18 = vector.broadcast %c-1_i32 : i32 to vector<1x128xi32>
    %19 = arith.addi %3, %18 : vector<1x128xi32>
    %c0_i32_4 = arith.constant 0 : i32
    %20 = vector.broadcast %c0_i32_4 : i32 to vector<1x128xi32>
    %21 = arith.cmpi sge, %19, %20 : vector<1x128xi32>
    %c32_i32_5 = arith.constant 32 : i32
    %22 = vector.broadcast %c32_i32_5 : i32 to vector<1x128xi32>
    %23 = arith.cmpi slt, %19, %22 : vector<1x128xi32>
    %24 = arith.andi %21, %23 : vector<1x128xi1>
    %c1_i32 = arith.constant 1 : i32
    %25 = vector.broadcast %c1_i32 : i32 to vector<1x128xi32>
    %26 = arith.addi %3, %25 : vector<1x128xi32>
    %c0_i32_6 = arith.constant 0 : i32
    %27 = vector.broadcast %c0_i32_6 : i32 to vector<1x128xi32>
    %28 = arith.cmpi sge, %26, %27 : vector<1x128xi32>
    %c32_i32_7 = arith.constant 32 : i32
    %29 = vector.broadcast %c32_i32_7 : i32 to vector<1x128xi32>
    %30 = arith.cmpi slt, %26, %29 : vector<1x128xi32>
    %31 = arith.andi %28, %30 : vector<1x128xi1>
    %c2_i32 = arith.constant 2 : i32
    %32 = vector.broadcast %c2_i32 : i32 to vector<1x128xi32>
    %33 = arith.addi %3, %32 : vector<1x128xi32>
    %c0_i32_8 = arith.constant 0 : i32
    %34 = vector.broadcast %c0_i32_8 : i32 to vector<1x128xi32>
    %35 = arith.cmpi sge, %33, %34 : vector<1x128xi32>
    %c32_i32_9 = arith.constant 32 : i32
    %36 = vector.broadcast %c32_i32_9 : i32 to vector<1x128xi32>
    %37 = arith.cmpi slt, %33, %36 : vector<1x128xi32>
    %38 = arith.andi %35, %37 : vector<1x128xi1>
    %c3_i32 = arith.constant 3 : i32
    %39 = vector.broadcast %c3_i32 : i32 to vector<1x128xi32>
    %40 = arith.addi %3, %39 : vector<1x128xi32>
    %c0_i32_10 = arith.constant 0 : i32
    %41 = vector.broadcast %c0_i32_10 : i32 to vector<1x128xi32>
    %42 = arith.cmpi sge, %40, %41 : vector<1x128xi32>
    %c32_i32_11 = arith.constant 32 : i32
    %43 = vector.broadcast %c32_i32_11 : i32 to vector<1x128xi32>
    %44 = arith.cmpi slt, %40, %43 : vector<1x128xi32>
    %45 = arith.andi %42, %44 : vector<1x128xi1>
    %c32_i32_12 = arith.constant 32 : i32
    %46 = vector.broadcast %c32_i32_12 : i32 to vector<1x128xi32>
    %47 = arith.cmpi slt, %3, %46 : vector<1x128xi32>
    %c0_13 = arith.constant 0 : index
    %c0_14 = arith.constant 0 : index
    %48 = vector.load %arg3[%c0_13, %c0_14] : memref<16x128xf32, #tpu.memory_space<vmem>>, vector<16x128xf32>
    %c0_15 = arith.constant 0 : index
    %c0_16 = arith.constant 0 : index
    %49 = vector.load %arg4[%c0_15, %c0_16] : memref<16x112xbf16, #tpu.memory_space<vmem>>, vector<16x112xbf16>
    %c0_17 = arith.constant 0 : index
    %c0_18 = arith.constant 0 : index
    %50 = vector.load %arg5[%c0_17, %c0_18] : memref<16x1xf32, #tpu.memory_space<vmem>>, vector<16x1xf32>
    %51 = vector.extract_strided_slice %48 {offsets = [0, 125], sizes = [16, 3], strides = [1, 1]} : vector<16x128xf32> to vector<16x3xf32>
    %52 = vector.extract_strided_slice %48 {offsets = [0, 0], sizes = [16, 125], strides = [1, 1]} : vector<16x128xf32> to vector<16x125xf32>
    %53 = tpu.concatenate %51, %52 in 1 : vector<16x3xf32>, vector<16x125xf32> -> vector<16x128xf32>
    %cst = arith.constant 0.000000e+00 : f32
    %54 = vector.shape_cast %10 : vector<1x128xi1> to vector<1x128xi1>
    %55 = vector.broadcast %54 : vector<1x128xi1> to vector<16x128xi1>
    %56 = vector.broadcast %cst : f32 to vector<16x128xf32>
    %57 = arith.select %55, %53, %56 : vector<16x128xi1>, vector<16x128xf32>
    %58 = vector.extract_strided_slice %48 {offsets = [0, 126], sizes = [16, 2], strides = [1, 1]} : vector<16x128xf32> to vector<16x2xf32>
    %59 = vector.extract_strided_slice %48 {offsets = [0, 0], sizes = [16, 126], strides = [1, 1]} : vector<16x128xf32> to vector<16x126xf32>
    %60 = tpu.concatenate %58, %59 in 1 : vector<16x2xf32>, vector<16x126xf32> -> vector<16x128xf32>
    %cst_19 = arith.constant 0.000000e+00 : f32
    %61 = vector.shape_cast %17 : vector<1x128xi1> to vector<1x128xi1>
    %62 = vector.broadcast %61 : vector<1x128xi1> to vector<16x128xi1>
    %63 = vector.broadcast %cst_19 : f32 to vector<16x128xf32>
    %64 = arith.select %62, %60, %63 : vector<16x128xi1>, vector<16x128xf32>
    %65 = vector.extract_strided_slice %48 {offsets = [0, 127], sizes = [16, 1], strides = [1, 1]} : vector<16x128xf32> to vector<16x1xf32>
    %66 = vector.extract_strided_slice %48 {offsets = [0, 0], sizes = [16, 127], strides = [1, 1]} : vector<16x128xf32> to vector<16x127xf32>
    %67 = tpu.concatenate %65, %66 in 1 : vector<16x1xf32>, vector<16x127xf32> -> vector<16x128xf32>
    %cst_20 = arith.constant 0.000000e+00 : f32
    %68 = vector.shape_cast %24 : vector<1x128xi1> to vector<1x128xi1>
    %69 = vector.broadcast %68 : vector<1x128xi1> to vector<16x128xi1>
    %70 = vector.broadcast %cst_20 : f32 to vector<16x128xf32>
    %71 = arith.select %69, %67, %70 : vector<16x128xi1>, vector<16x128xf32>
    %72 = vector.extract_strided_slice %48 {offsets = [0, 1], sizes = [16, 127], strides = [1, 1]} : vector<16x128xf32> to vector<16x127xf32>
    %73 = vector.extract_strided_slice %48 {offsets = [0, 0], sizes = [16, 1], strides = [1, 1]} : vector<16x128xf32> to vector<16x1xf32>
    %74 = tpu.concatenate %72, %73 in 1 : vector<16x127xf32>, vector<16x1xf32> -> vector<16x128xf32>
    %cst_21 = arith.constant 0.000000e+00 : f32
    %75 = vector.shape_cast %31 : vector<1x128xi1> to vector<1x128xi1>
    %76 = vector.broadcast %75 : vector<1x128xi1> to vector<16x128xi1>
    %77 = vector.broadcast %cst_21 : f32 to vector<16x128xf32>
    %78 = arith.select %76, %74, %77 : vector<16x128xi1>, vector<16x128xf32>
    %79 = vector.extract_strided_slice %48 {offsets = [0, 2], sizes = [16, 126], strides = [1, 1]} : vector<16x128xf32> to vector<16x126xf32>
    %80 = vector.extract_strided_slice %48 {offsets = [0, 0], sizes = [16, 2], strides = [1, 1]} : vector<16x128xf32> to vector<16x2xf32>
    %81 = tpu.concatenate %79, %80 in 1 : vector<16x126xf32>, vector<16x2xf32> -> vector<16x128xf32>
    %cst_22 = arith.constant 0.000000e+00 : f32
    %82 = vector.shape_cast %38 : vector<1x128xi1> to vector<1x128xi1>
    %83 = vector.broadcast %82 : vector<1x128xi1> to vector<16x128xi1>
    %84 = vector.broadcast %cst_22 : f32 to vector<16x128xf32>
    %85 = arith.select %83, %81, %84 : vector<16x128xi1>, vector<16x128xf32>
    %86 = vector.extract_strided_slice %48 {offsets = [0, 3], sizes = [16, 125], strides = [1, 1]} : vector<16x128xf32> to vector<16x125xf32>
    %87 = vector.extract_strided_slice %48 {offsets = [0, 0], sizes = [16, 3], strides = [1, 1]} : vector<16x128xf32> to vector<16x3xf32>
    %88 = tpu.concatenate %86, %87 in 1 : vector<16x125xf32>, vector<16x3xf32> -> vector<16x128xf32>
    %cst_23 = arith.constant 0.000000e+00 : f32
    %89 = vector.shape_cast %45 : vector<1x128xi1> to vector<1x128xi1>
    %90 = vector.broadcast %89 : vector<1x128xi1> to vector<16x128xi1>
    %91 = vector.broadcast %cst_23 : f32 to vector<16x128xf32>
    %92 = arith.select %90, %88, %91 : vector<16x128xi1>, vector<16x128xf32>
    %93 = tpu.concatenate %57, %64, %71, %48, %78, %85, %92 in 0 : vector<16x128xf32>, vector<16x128xf32>, vector<16x128xf32>, vector<16x128xf32>, vector<16x128xf32>, vector<16x128xf32>, vector<16x128xf32> -> vector<112x128xf32>
    %94 = arith.truncf %93 : vector<112x128xf32> to vector<112x128xbf16>
    %cst_24 = arith.constant dense<0.000000e+00> : vector<16x128xf32>
    %95 = tpu.matmul %49, %94, %cst_24 {dimension_numbers = #tpu.dot_dimension_numbers<[1], [0], [0], [1], [0, 0, 1, 1], [], []>} : vector<16x112xbf16>, vector<112x128xbf16>, vector<16x128xf32> -> vector<16x128xf32>
    %96 = vector.broadcast %50 : vector<16x1xf32> to vector<16x128xf32>
    %97 = arith.addf %95, %96 : vector<16x128xf32>
    %cst_25 = arith.constant 0.000000e+00 : f32
    %98 = vector.shape_cast %47 : vector<1x128xi1> to vector<1x128xi1>
    %99 = vector.broadcast %98 : vector<1x128xi1> to vector<16x128xi1>
    %100 = vector.broadcast %cst_25 : f32 to vector<16x128xf32>
    %101 = arith.select %99, %97, %100 : vector<16x128xi1>, vector<16x128xf32>
    %cst_26 = arith.constant dense<0.000000e+00> : vector<16xf32>
    %102 = vector.multi_reduction <add>, %101, %cst_26 [1] : vector<16x128xf32> to vector<16xf32>
    %103 = vector.shape_cast %102 : vector<16xf32> to vector<16x1xf32>
    %104 = arith.mulf %101, %101 : vector<16x128xf32>
    %cst_27 = arith.constant dense<0.000000e+00> : vector<16xf32>
    %105 = vector.multi_reduction <add>, %104, %cst_27 [1] : vector<16x128xf32> to vector<16xf32>
    %106 = vector.shape_cast %105 : vector<16xf32> to vector<16x1xf32>
    %cst_28 = arith.constant 3.125000e-02 : f32
    %107 = vector.broadcast %cst_28 : f32 to vector<16x1xf32>
    %108 = arith.mulf %103, %107 : vector<16x1xf32>
    %cst_29 = arith.constant 3.125000e-02 : f32
    %109 = vector.broadcast %cst_29 : f32 to vector<16x1xf32>
    %110 = arith.mulf %106, %109 : vector<16x1xf32>
    %111 = arith.mulf %108, %108 : vector<16x1xf32>
    %112 = arith.subf %110, %111 : vector<16x1xf32>
    %cst_30 = arith.constant 0.000000e+00 : f32
    %113 = vector.broadcast %cst_30 : f32 to vector<16x1xf32>
    %114 = arith.maximumf %112, %113 : vector<16x1xf32>
    %cst_31 = arith.constant 9.99999974E-6 : f32
    %115 = vector.broadcast %cst_31 : f32 to vector<16x1xf32>
    %116 = arith.addf %114, %115 : vector<16x1xf32>
    %117 = math.rsqrt %116 : vector<16x1xf32>
    %cst_32 = arith.constant 0.000000e+00 : f32
    %118 = vector.broadcast %cst_32 : f32 to vector<16x1xf32>
    %119 = arith.subf %118, %108 : vector<16x1xf32>
    %120 = arith.mulf %119, %117 : vector<16x1xf32>
    %121 = vector.broadcast %117 : vector<16x1xf32> to vector<16x128xf32>
    %122 = arith.mulf %97, %121 : vector<16x128xf32>
    %123 = vector.broadcast %120 : vector<16x1xf32> to vector<16x128xf32>
    %124 = arith.addf %122, %123 : vector<16x128xf32>
    %cst_33 = arith.constant 0.000000e+00 : f32
    %125 = vector.broadcast %cst_33 : f32 to vector<16x128xf32>
    %126 = arith.cmpf ogt, %124, %125 : vector<16x128xf32>
    %127 = vector.broadcast %0 : f32 to vector<16x128xf32>
    %128 = arith.mulf %127, %124 : vector<16x128xf32>
    %129 = arith.select %126, %124, %128 : vector<16x128xi1>, vector<16x128xf32>
    %cst_34 = arith.constant 0.000000e+00 : f32
    %130 = vector.shape_cast %47 : vector<1x128xi1> to vector<1x128xi1>
    %131 = vector.broadcast %130 : vector<1x128xi1> to vector<16x128xi1>
    %132 = vector.broadcast %cst_34 : f32 to vector<16x128xf32>
    %133 = arith.select %131, %129, %132 : vector<16x128xi1>, vector<16x128xf32>
    %c0_35 = arith.constant 0 : index
    %c0_36 = arith.constant 0 : index
    %134 = vector.load %arg6[%c0_35, %c0_36] : memref<16x112xbf16, #tpu.memory_space<vmem>>, vector<16x112xbf16>
    %c0_37 = arith.constant 0 : index
    %c0_38 = arith.constant 0 : index
    %135 = vector.load %arg7[%c0_37, %c0_38] : memref<16x1xf32, #tpu.memory_space<vmem>>, vector<16x1xf32>
    %136 = vector.extract_strided_slice %133 {offsets = [0, 125], sizes = [16, 3], strides = [1, 1]} : vector<16x128xf32> to vector<16x3xf32>
    %137 = vector.extract_strided_slice %133 {offsets = [0, 0], sizes = [16, 125], strides = [1, 1]} : vector<16x128xf32> to vector<16x125xf32>
    %138 = tpu.concatenate %136, %137 in 1 : vector<16x3xf32>, vector<16x125xf32> -> vector<16x128xf32>
    %cst_39 = arith.constant 0.000000e+00 : f32
    %139 = vector.shape_cast %10 : vector<1x128xi1> to vector<1x128xi1>
    %140 = vector.broadcast %139 : vector<1x128xi1> to vector<16x128xi1>
    %141 = vector.broadcast %cst_39 : f32 to vector<16x128xf32>
    %142 = arith.select %140, %138, %141 : vector<16x128xi1>, vector<16x128xf32>
    %143 = vector.extract_strided_slice %133 {offsets = [0, 126], sizes = [16, 2], strides = [1, 1]} : vector<16x128xf32> to vector<16x2xf32>
    %144 = vector.extract_strided_slice %133 {offsets = [0, 0], sizes = [16, 126], strides = [1, 1]} : vector<16x128xf32> to vector<16x126xf32>
    %145 = tpu.concatenate %143, %144 in 1 : vector<16x2xf32>, vector<16x126xf32> -> vector<16x128xf32>
    %cst_40 = arith.constant 0.000000e+00 : f32
    %146 = vector.shape_cast %17 : vector<1x128xi1> to vector<1x128xi1>
    %147 = vector.broadcast %146 : vector<1x128xi1> to vector<16x128xi1>
    %148 = vector.broadcast %cst_40 : f32 to vector<16x128xf32>
    %149 = arith.select %147, %145, %148 : vector<16x128xi1>, vector<16x128xf32>
    %150 = vector.extract_strided_slice %133 {offsets = [0, 127], sizes = [16, 1], strides = [1, 1]} : vector<16x128xf32> to vector<16x1xf32>
    %151 = vector.extract_strided_slice %133 {offsets = [0, 0], sizes = [16, 127], strides = [1, 1]} : vector<16x128xf32> to vector<16x127xf32>
    %152 = tpu.concatenate %150, %151 in 1 : vector<16x1xf32>, vector<16x127xf32> -> vector<16x128xf32>
    %cst_41 = arith.constant 0.000000e+00 : f32
    %153 = vector.shape_cast %24 : vector<1x128xi1> to vector<1x128xi1>
    %154 = vector.broadcast %153 : vector<1x128xi1> to vector<16x128xi1>
    %155 = vector.broadcast %cst_41 : f32 to vector<16x128xf32>
    %156 = arith.select %154, %152, %155 : vector<16x128xi1>, vector<16x128xf32>
    %157 = vector.extract_strided_slice %133 {offsets = [0, 1], sizes = [16, 127], strides = [1, 1]} : vector<16x128xf32> to vector<16x127xf32>
    %158 = vector.extract_strided_slice %133 {offsets = [0, 0], sizes = [16, 1], strides = [1, 1]} : vector<16x128xf32> to vector<16x1xf32>
    %159 = tpu.concatenate %157, %158 in 1 : vector<16x127xf32>, vector<16x1xf32> -> vector<16x128xf32>
    %cst_42 = arith.constant 0.000000e+00 : f32
    %160 = vector.shape_cast %31 : vector<1x128xi1> to vector<1x128xi1>
    %161 = vector.broadcast %160 : vector<1x128xi1> to vector<16x128xi1>
    %162 = vector.broadcast %cst_42 : f32 to vector<16x128xf32>
    %163 = arith.select %161, %159, %162 : vector<16x128xi1>, vector<16x128xf32>
    %164 = vector.extract_strided_slice %133 {offsets = [0, 2], sizes = [16, 126], strides = [1, 1]} : vector<16x128xf32> to vector<16x126xf32>
    %165 = vector.extract_strided_slice %133 {offsets = [0, 0], sizes = [16, 2], strides = [1, 1]} : vector<16x128xf32> to vector<16x2xf32>
    %166 = tpu.concatenate %164, %165 in 1 : vector<16x126xf32>, vector<16x2xf32> -> vector<16x128xf32>
    %cst_43 = arith.constant 0.000000e+00 : f32
    %167 = vector.shape_cast %38 : vector<1x128xi1> to vector<1x128xi1>
    %168 = vector.broadcast %167 : vector<1x128xi1> to vector<16x128xi1>
    %169 = vector.broadcast %cst_43 : f32 to vector<16x128xf32>
    %170 = arith.select %168, %166, %169 : vector<16x128xi1>, vector<16x128xf32>
    %171 = vector.extract_strided_slice %133 {offsets = [0, 3], sizes = [16, 125], strides = [1, 1]} : vector<16x128xf32> to vector<16x125xf32>
    %172 = vector.extract_strided_slice %133 {offsets = [0, 0], sizes = [16, 3], strides = [1, 1]} : vector<16x128xf32> to vector<16x3xf32>
    %173 = tpu.concatenate %171, %172 in 1 : vector<16x125xf32>, vector<16x3xf32> -> vector<16x128xf32>
    %cst_44 = arith.constant 0.000000e+00 : f32
    %174 = vector.shape_cast %45 : vector<1x128xi1> to vector<1x128xi1>
    %175 = vector.broadcast %174 : vector<1x128xi1> to vector<16x128xi1>
    %176 = vector.broadcast %cst_44 : f32 to vector<16x128xf32>
    %177 = arith.select %175, %173, %176 : vector<16x128xi1>, vector<16x128xf32>
    %178 = tpu.concatenate %142, %149, %156, %133, %163, %170, %177 in 0 : vector<16x128xf32>, vector<16x128xf32>, vector<16x128xf32>, vector<16x128xf32>, vector<16x128xf32>, vector<16x128xf32>, vector<16x128xf32> -> vector<112x128xf32>
    %179 = arith.truncf %178 : vector<112x128xf32> to vector<112x128xbf16>
    %cst_45 = arith.constant dense<0.000000e+00> : vector<16x128xf32>
    %180 = tpu.matmul %134, %179, %cst_45 {dimension_numbers = #tpu.dot_dimension_numbers<[1], [0], [0], [1], [0, 0, 1, 1], [], []>} : vector<16x112xbf16>, vector<112x128xbf16>, vector<16x128xf32> -> vector<16x128xf32>
    %181 = vector.broadcast %135 : vector<16x1xf32> to vector<16x128xf32>
    %182 = arith.addf %180, %181 : vector<16x128xf32>
    %cst_46 = arith.constant 0.000000e+00 : f32
    %183 = vector.shape_cast %47 : vector<1x128xi1> to vector<1x128xi1>
    %184 = vector.broadcast %183 : vector<1x128xi1> to vector<16x128xi1>
    %185 = vector.broadcast %cst_46 : f32 to vector<16x128xf32>
    %186 = arith.select %184, %182, %185 : vector<16x128xi1>, vector<16x128xf32>
    %cst_47 = arith.constant dense<0.000000e+00> : vector<16xf32>
    %187 = vector.multi_reduction <add>, %186, %cst_47 [1] : vector<16x128xf32> to vector<16xf32>
    %188 = vector.shape_cast %187 : vector<16xf32> to vector<16x1xf32>
    %189 = arith.mulf %186, %186 : vector<16x128xf32>
    %cst_48 = arith.constant dense<0.000000e+00> : vector<16xf32>
    %190 = vector.multi_reduction <add>, %189, %cst_48 [1] : vector<16x128xf32> to vector<16xf32>
    %191 = vector.shape_cast %190 : vector<16xf32> to vector<16x1xf32>
    %cst_49 = arith.constant 3.125000e-02 : f32
    %192 = vector.broadcast %cst_49 : f32 to vector<16x1xf32>
    %193 = arith.mulf %188, %192 : vector<16x1xf32>
    %cst_50 = arith.constant 3.125000e-02 : f32
    %194 = vector.broadcast %cst_50 : f32 to vector<16x1xf32>
    %195 = arith.mulf %191, %194 : vector<16x1xf32>
    %196 = arith.mulf %193, %193 : vector<16x1xf32>
    %197 = arith.subf %195, %196 : vector<16x1xf32>
    %cst_51 = arith.constant 0.000000e+00 : f32
    %198 = vector.broadcast %cst_51 : f32 to vector<16x1xf32>
    %199 = arith.maximumf %197, %198 : vector<16x1xf32>
    %cst_52 = arith.constant 9.99999974E-6 : f32
    %200 = vector.broadcast %cst_52 : f32 to vector<16x1xf32>
    %201 = arith.addf %199, %200 : vector<16x1xf32>
    %202 = math.rsqrt %201 : vector<16x1xf32>
    %cst_53 = arith.constant 0.000000e+00 : f32
    %203 = vector.broadcast %cst_53 : f32 to vector<16x1xf32>
    %204 = arith.subf %203, %193 : vector<16x1xf32>
    %205 = arith.mulf %204, %202 : vector<16x1xf32>
    %206 = vector.broadcast %202 : vector<16x1xf32> to vector<16x128xf32>
    %207 = arith.mulf %182, %206 : vector<16x128xf32>
    %208 = vector.broadcast %205 : vector<16x1xf32> to vector<16x128xf32>
    %209 = arith.addf %207, %208 : vector<16x128xf32>
    %cst_54 = arith.constant 0.000000e+00 : f32
    %210 = vector.broadcast %cst_54 : f32 to vector<16x128xf32>
    %211 = arith.cmpf ogt, %209, %210 : vector<16x128xf32>
    %212 = vector.broadcast %1 : f32 to vector<16x128xf32>
    %213 = arith.mulf %212, %209 : vector<16x128xf32>
    %214 = arith.select %211, %209, %213 : vector<16x128xi1>, vector<16x128xf32>
    %cst_55 = arith.constant 0.000000e+00 : f32
    %215 = vector.shape_cast %47 : vector<1x128xi1> to vector<1x128xi1>
    %216 = vector.broadcast %215 : vector<1x128xi1> to vector<16x128xi1>
    %217 = vector.broadcast %cst_55 : f32 to vector<16x128xf32>
    %218 = arith.select %216, %214, %217 : vector<16x128xi1>, vector<16x128xf32>
    %cst_56 = arith.constant dense<0.000000e+00> : vector<16xf32>
    %219 = vector.multi_reduction <add>, %218, %cst_56 [1] : vector<16x128xf32> to vector<16xf32>
    %220 = vector.shape_cast %219 : vector<16xf32> to vector<16x1xf32>
    %cst_57 = arith.constant 3.125000e-02 : f32
    %221 = vector.broadcast %cst_57 : f32 to vector<16x1xf32>
    %222 = arith.mulf %220, %221 : vector<16x1xf32>
    %c0_58 = arith.constant 0 : index
    %c0_59 = arith.constant 0 : index
    %223 = vector.load %arg8[%c0_58, %c0_59] : memref<2x16xf32, #tpu.memory_space<vmem>>, vector<2x16xf32>
    %cst_60 = arith.constant dense<0.000000e+00> : vector<2x1xf32>
    %224 = tpu.matmul %223, %222, %cst_60 {dimension_numbers = #tpu.dot_dimension_numbers<[1], [0], [0], [1], [0, 0, 1, 1], [], []>} : vector<2x16xf32>, vector<16x1xf32>, vector<2x1xf32> -> vector<2x1xf32>
    %c0_61 = arith.constant 0 : index
    %c0_62 = arith.constant 0 : index
    %225 = vector.load %arg9[%c0_61, %c0_62] : memref<2x1xf32, #tpu.memory_space<vmem>>, vector<2x1xf32>
    %226 = arith.addf %224, %225 : vector<2x1xf32>
    %cst_63 = arith.constant 0.000000e+00 : f32
    %227 = vector.broadcast %cst_63 : f32 to vector<2x1xf32>
    %228 = arith.cmpf ogt, %226, %227 : vector<2x1xf32>
    %229 = vector.broadcast %2 : f32 to vector<2x1xf32>
    %230 = arith.mulf %229, %226 : vector<2x1xf32>
    %231 = arith.select %228, %226, %230 : vector<2x1xi1>, vector<2x1xf32>
    %c0_64 = arith.constant 0 : index
    %c0_65 = arith.constant 0 : index
    %232 = vector.load %arg10[%c0_64, %c0_65] : memref<16x2xf32, #tpu.memory_space<vmem>>, vector<16x2xf32>
    %cst_66 = arith.constant dense<0.000000e+00> : vector<16x1xf32>
    %233 = tpu.matmul %232, %231, %cst_66 {dimension_numbers = #tpu.dot_dimension_numbers<[1], [0], [0], [1], [0, 0, 1, 1], [], []>} : vector<16x2xf32>, vector<2x1xf32>, vector<16x1xf32> -> vector<16x1xf32>
    %c0_67 = arith.constant 0 : index
    %c0_68 = arith.constant 0 : index
    %234 = vector.load %arg11[%c0_67, %c0_68] : memref<16x1xf32, #tpu.memory_space<vmem>>, vector<16x1xf32>
    %235 = arith.addf %233, %234 : vector<16x1xf32>
    %cst_69 = arith.constant 0.000000e+00 : f32
    %236 = vector.broadcast %cst_69 : f32 to vector<16x1xf32>
    %237 = arith.subf %236, %235 : vector<16x1xf32>
    %238 = math.exp %237 : vector<16x1xf32>
    %cst_70 = arith.constant 1.000000e+00 : f32
    %239 = vector.broadcast %cst_70 : f32 to vector<16x1xf32>
    %240 = arith.addf %239, %238 : vector<16x1xf32>
    %cst_71 = arith.constant 1.000000e+00 : f32
    %241 = vector.broadcast %cst_71 : f32 to vector<16x1xf32>
    %242 = arith.divf %241, %240 : vector<16x1xf32>
    %243 = arith.addf %48, %218 : vector<16x128xf32>
    %244 = vector.broadcast %242 : vector<16x1xf32> to vector<16x128xf32>
    %245 = arith.addf %243, %244 : vector<16x128xf32>
    %c0_72 = arith.constant 0 : index
    %c0_73 = arith.constant 0 : index
    %246 = vector.load %arg12[%c0_72, %c0_73] : memref<16x128xf32, #tpu.memory_space<vmem>>, vector<16x128xf32>
    tpu.vector_store %arg12[%c0_72, %c0_73], %245 {strides = array<i32>} : memref<16x128xf32, #tpu.memory_space<vmem>>, vector<16x128xf32>,
    return
  }
  func.func @transform_0(%arg0: i32) -> i32 {
    %c0_i32 = arith.constant 0 : i32
    %c0_i32_0 = arith.constant 0 : i32
    return %c0_i32 : i32
  }
  func.func @transform_1(%arg0: i32) -> (i32, i32) {
    %c0_i32 = arith.constant 0 : i32
    %c0_i32_0 = arith.constant 0 : i32
    %c0_i32_1 = arith.constant 0 : i32
    return %c0_i32, %c0_i32_0 : i32, i32
  }
  func.func @transform_2(%arg0: i32) -> (i32, i32) {
    %c0_i32 = arith.constant 0 : i32
    %c0_i32_0 = arith.constant 0 : i32
    return %c0_i32, %arg0 : i32, i32
  }
  func.func @transform_3(%arg0: i32) -> (i32, i32) {
    %c0_i32 = arith.constant 0 : i32
    %c0_i32_0 = arith.constant 0 : i32
    %c0_i32_1 = arith.constant 0 : i32
    return %c0_i32, %c0_i32_0 : i32, i32
  }
  func.func @transform_4(%arg0: i32) -> (i32, i32) {
    %c0_i32 = arith.constant 0 : i32
    %c0_i32_0 = arith.constant 0 : i32
    %c0_i32_1 = arith.constant 0 : i32
    return %c0_i32, %c0_i32_0 : i32, i32
  }
  func.func @transform_5(%arg0: i32) -> (i32, i32) {
    %c0_i32 = arith.constant 0 : i32
    %c0_i32_0 = arith.constant 0 : i32
    %c0_i32_1 = arith.constant 0 : i32
    return %c0_i32, %c0_i32_0 : i32, i32
  }
  func.func @transform_6(%arg0: i32) -> (i32, i32) {
    %c0_i32 = arith.constant 0 : i32
    %c0_i32_0 = arith.constant 0 : i32
    %c0_i32_1 = arith.constant 0 : i32
    return %c0_i32, %c0_i32_0 : i32, i32
  }
  func.func @transform_7(%arg0: i32) -> (i32, i32) {
    %c0_i32 = arith.constant 0 : i32
    %c0_i32_0 = arith.constant 0 : i32
    %c0_i32_1 = arith.constant 0 : i32
    return %c0_i32, %c0_i32_0 : i32, i32
  }
  func.func @transform_8(%arg0: i32) -> (i32, i32) {
    %c0_i32 = arith.constant 0 : i32
    %c0_i32_0 = arith.constant 0 : i32
    %c0_i32_1 = arith.constant 0 : i32
    return %c0_i32, %c0_i32_0 : i32, i32
  }
  func.func @transform_9(%arg0: i32) -> (i32, i32) {
    %c0_i32 = arith.constant 0 : i32
    %c0_i32_0 = arith.constant 0 : i32
    %c0_i32_1 = arith.constant 0 : i32
    return %c0_i32, %c0_i32_0 : i32, i32
  }
  func.func @transform_10(%arg0: i32) -> (i32, i32) {
    %c0_i32 = arith.constant 0 : i32
    %c0_i32_0 = arith.constant 0 : i32
    %c0_i32_1 = arith.constant 0 : i32
    return %c0_i32, %c0_i32_0 : i32, i32
  }
  func.func @transform_11(%arg0: i32) -> (i32, i32) {
    %c0_i32 = arith.constant 0 : i32
    %c0_i32_0 = arith.constant 0 : i32
    return %c0_i32, %arg0 : i32, i32
  }
}

</mosaic_0001>

<llo_original>
// kernel: tpu_custom_call.1
$region0: #{tpu_custom_call.1}
  #allocation0 [shape = 'u32[]', space=smem, size = 0x4, offset = 0x4, fixed_abs, tag = 'smem constant byte address 0x4 - core index']
  #allocation1 [shape = 'u32[144,128]{1,0:T(1,128)}', space=vmem, size = 0x12000, scoped, tag = 'internal scratch']
  %s0 = inlined_call_operand.vmem [shape: f32[3], index: 0, kind: input, shape index: {}]
  %s1 = inlined_call_operand.vmem [shape: s32[1,128], index: 1, kind: input, shape index: {}]
  %s2 = inlined_call_operand.vmem [shape: f32[16,256], index: 2, kind: input, shape index: {}]
  %s3 = inlined_call_operand.vmem [shape: bf16[16,112], index: 3, kind: input, shape index: {}]
  %s4 = inlined_call_operand.vmem [shape: f32[16,1], index: 4, kind: input, shape index: {}]
  %s5 = inlined_call_operand.vmem [shape: bf16[16,112], index: 5, kind: input, shape index: {}]
  %s6 = inlined_call_operand.vmem [shape: f32[16,1], index: 6, kind: input, shape index: {}]
  %s7 = inlined_call_operand.vmem [shape: f32[2,16], index: 7, kind: input, shape index: {}]
  %s8 = inlined_call_operand.vmem [shape: f32[2,1], index: 8, kind: input, shape index: {}]
  %s9 = inlined_call_operand.vmem [shape: f32[16,2], index: 9, kind: input, shape index: {}]
  %s10 = inlined_call_operand.vmem [shape: f32[16,1], index: 10, kind: input, shape index: {}]
  %s11 = inlined_call_operand.hbm [shape: f32[16,256], index: 11, kind: output, shape index: {}]
  %s12 = sld [smem:[#allocation0]]
  $region119: #{tpu_custom_call.1} parent=0
    _
  %s14 = ssub.s32 1, %s12
  %s15 = scalar_select 0, %s14, %s12
  $region1: #{tpu_custom_call.1} parent=0
    #allocation2 [shape = 'u8[512]{0}', space=smem, size = 0x200, scoped, tag = 'input window, operand 0, single buffered']
    #allocation3 [shape = 's32[2]{0}', space=sflag, size = 0x8, scoped, tag = 'scoped memory for tpu_custom_call.1']
    #allocation4 [shape = 's32[2]{0}', space=sflag, size = 0x8, scoped, tag = 'scoped memory for tpu_custom_call.1']
    #allocation5 [shape = 'u8[16384]{0}', space=vmem, size = 0x4000, scoped, tag = 'input window, operand 2']
    #allocation6 [shape = 'u8[16384]{0}', space=vmem, size = 0x4000, scoped, tag = 'output window, operand 0']
    %16 = vsyncpa [#allocation4], 0
    %17 = vsyncpa [#allocation3], 0
    %s18 = scalar_lea.sflag [#allocation3], 1
    %19 = vsyncpa %s18, 0
    loop: start=0, step=1, limit=4
    $region2: #{tpu_custom_call.1} parent=1 // loop_pre_header
      _
    $region3: #{tpu_custom_call.1} parent=1 // loop_header
      %s21 = sphi 0, %s25
      %p22 = scmp.ge.s32.totalorder %s21, 4
      %s29 = sphi 0, %s29
      %s31 = sphi 0, %s29
      %s32 = sphi 0, %s31
      %s46 = sphi 0, %s32
      %s50 = sphi 0, %s50
      %s52 = sphi 0, %s50
      %s53 = sphi 0, %s52
      %s67 = sphi 0, %s53
      %s73 = sphi 0, %s75
      %s76 = sphi 0, %s73
      %s77 = sphi 0, %s76
      %s93 = sphi 0, %s77
      %s97 = sphi 0, %s97
      %s99 = sphi 0, %s97
      %s100 = sphi 0, %s99
      %s114 = sphi 0, %s100
      %s118 = sphi 0, %s118
      %s120 = sphi 0, %s118
      %s121 = sphi 0, %s120
      %s135 = sphi 0, %s121
      %s139 = sphi 0, %s139
      %s141 = sphi 0, %s139
      %s142 = sphi 0, %s141
      %s156 = sphi 0, %s142
      %s160 = sphi 0, %s160
      %s162 = sphi 0, %s160
      %s163 = sphi 0, %s162
      %s177 = sphi 0, %s163
      %s181 = sphi 0, %s181
      %s183 = sphi 0, %s181
      %s184 = sphi 0, %s183
      %s198 = sphi 0, %s184
      %s202 = sphi 0, %s202
      %s204 = sphi 0, %s202
      %s205 = sphi 0, %s204
      %s219 = sphi 0, %s205
      %s223 = sphi 0, %s223
      %s225 = sphi 0, %s223
      %s226 = sphi 0, %s225
      %s240 = sphi 0, %s226
      %s244 = sphi 0, %s244
      %s246 = sphi 0, %s244
      %s247 = sphi 0, %s246
      %s261 = sphi 0, %s247
      %s267 = sphi 0, %s269
      %s270 = sphi 0, %s267
      %s271 = sphi 0, %s270
      %s287 = sphi 0, %s271
    $region4: #{tpu_custom_call.1} parent=1 // loop_header_branch
      %24 = sbr.rel (%p22) target = $region8
    $region5: #{tpu_custom_call.1} parent=1 // loop_body
      %s26 = ssub.s32 %s21, 1
      %s27 = ssub.s32 %s21, 2
      %s28 = sadd.s32 %s21, 1
      %s30 = sadd.s32 %s29, 1
      %p33 = scmp.eq.s32.totalorder %s21, 1
      %p34 = scmp.ne.s32.totalorder %s29, %s31
      %p35 = scmp.eq.s32.totalorder %s21, 0
      %p36 = por %p34, %p35
      %p37 = scmp.ne.s32.totalorder %s29, %s31
      %p38 = scmp.eq.s32.totalorder %s26, 1
      %p39 = por %p37, %p38
      %p40 = scmp.ne.s32.totalorder %s31, %s32
      %p41 = scmp.eq.s32.totalorder %s26, 0
      %p42 = por %p40, %p41
      %p43 = scmp.ne.s32.totalorder %s31, %s32
      %p44 = scmp.eq.s32.totalorder %s27, 1
      %p45 = por %p43, %p44
      %p47 = scmp.ne.s32.totalorder %s32, %s46
      %p48 = scmp.eq.s32.totalorder %s27, 0
      %p49 = por %p47, %p48
      %s51 = sadd.s32 %s50, 1
      %p54 = scmp.eq.s32.totalorder %s21, 1
      %p55 = scmp.ne.s32.totalorder %s50, %s52
      %p56 = scmp.eq.s32.totalorder %s21, 0
      %p57 = por %p55, %p56
      %p58 = scmp.ne.s32.totalorder %s50, %s52
      %p59 = scmp.eq.s32.totalorder %s26, 1
      %p60 = por %p58, %p59
      %p61 = scmp.ne.s32.totalorder %s52, %s53
      %p62 = scmp.eq.s32.totalorder %s26, 0
      %p63 = por %p61, %p62
      %p64 = scmp.ne.s32.totalorder %s52, %s53
      %p65 = scmp.eq.s32.totalorder %s27, 1
      %p66 = por %p64, %p65
      %p68 = scmp.ne.s32.totalorder %s53, %s67
      %p69 = scmp.eq.s32.totalorder %s27, 0
      %p70 = por %p68, %p69
      %s71 = ssub.s32 %s21, %s28
      %p72 = scmp.eq.s32.totalorder %s71, 0
      %s74 = sadd.s32 %s73, 1
      %s75 = scalar_select %p72, %s73, %s74
      %p78 = pneg %p72
      %p79 = scmp.eq.s32.totalorder %s21, 1
      %p80 = por %p78, %p79
      %p81 = scmp.ne.s32.totalorder %s73, %s76
      %p82 = scmp.eq.s32.totalorder %s21, 0
      %p83 = por %p81, %p82
      %p84 = scmp.ne.s32.totalorder %s73, %s76
      %p85 = scmp.eq.s32.totalorder %s26, 1
      %p86 = por %p84, %p85
      %p87 = scmp.ne.s32.totalorder %s76, %s77
      %p88 = scmp.eq.s32.totalorder %s26, 0
      %p89 = por %p87, %p88
      %p90 = scmp.ne.s32.totalorder %s76, %s77
      %p91 = scmp.eq.s32.totalorder %s27, 1
      %p92 = por %p90, %p91
      %p94 = scmp.ne.s32.totalorder %s77, %s93
      %p95 = scmp.eq.s32.totalorder %s27, 0
      %p96 = por %p94, %p95
      %s98 = sadd.s32 %s97, 1
      %p101 = scmp.eq.s32.totalorder %s21, 1
      %p102 = scmp.ne.s32.totalorder %s97, %s99
      %p103 = scmp.eq.s32.totalorder %s21, 0
      %p104 = por %p102, %p103
      %p105 = scmp.ne.s32.totalorder %s97, %s99
      %p106 = scmp.eq.s32.totalorder %s26, 1
      %p107 = por %p105, %p106
      %p108 = scmp.ne.s32.totalorder %s99, %s100
      %p109 = scmp.eq.s32.totalorder %s26, 0
      %p110 = por %p108, %p109
      %p111 = scmp.ne.s32.totalorder %s99, %s100
      %p112 = scmp.eq.s32.totalorder %s27, 1
      %p113 = por %p111, %p112
      %p115 = scmp.ne.s32.totalorder %s100, %s114
      %p116 = scmp.eq.s32.totalorder %s27, 0
      %p117 = por %p115, %p116
      %s119 = sadd.s32 %s118, 1
      %p122 = scmp.eq.s32.totalorder %s21, 1
      %p123 = scmp.ne.s32.totalorder %s118, %s120
      %p124 = scmp.eq.s32.totalorder %s21, 0
      %p125 = por %p123, %p124
      %p126 = scmp.ne.s32.totalorder %s118, %s120
      %p127 = scmp.eq.s32.totalorder %s26, 1
      %p128 = por %p126, %p127
      %p129 = scmp.ne.s32.totalorder %s120, %s121
      %p130 = scmp.eq.s32.totalorder %s26, 0
      %p131 = por %p129, %p130
      %p132 = scmp.ne.s32.totalorder %s120, %s121
      %p133 = scmp.eq.s32.totalorder %s27, 1
      %p134 = por %p132, %p133
      %p136 = scmp.ne.s32.totalorder %s121, %s135
      %p137 = scmp.eq.s32.totalorder %s27, 0
      %p138 = por %p136, %p137
      %s140 = sadd.s32 %s139, 1
      %p143 = scmp.eq.s32.totalorder %s21, 1
      %p144 = scmp.ne.s32.totalorder %s139, %s141
      %p145 = scmp.eq.s32.totalorder %s21, 0
      %p146 = por %p144, %p145
      %p147 = scmp.ne.s32.totalorder %s139, %s141
      %p148 = scmp.eq.s32.totalorder %s26, 1
      %p149 = por %p147, %p148
      %p150 = scmp.ne.s32.totalorder %s141, %s142
      %p151 = scmp.eq.s32.totalorder %s26, 0
      %p152 = por %p150, %p151
      %p153 = scmp.ne.s32.totalorder %s141, %s142
      %p154 = scmp.eq.s32.totalorder %s27, 1
      %p155 = por %p153, %p154
      %p157 = scmp.ne.s32.totalorder %s142, %s156
      %p158 = scmp.eq.s32.totalorder %s27, 0
      %p159 = por %p157, %p158
      %s161 = sadd.s32 %s160, 1
      %p164 = scmp.eq.s32.totalorder %s21, 1
      %p165 = scmp.ne.s32.totalorder %s160, %s162
      %p166 = scmp.eq.s32.totalorder %s21, 0
      %p167 = por %p165, %p166
      %p168 = scmp.ne.s32.totalorder %s160, %s162
      %p169 = scmp.eq.s32.totalorder %s26, 1
      %p170 = por %p168, %p169
      %p171 = scmp.ne.s32.totalorder %s162, %s163
      %p172 = scmp.eq.s32.totalorder %s26, 0
      %p173 = por %p171, %p172
      %p174 = scmp.ne.s32.totalorder %s162, %s163
      %p175 = scmp.eq.s32.totalorder %s27, 1
      %p176 = por %p174, %p175
      %p178 = scmp.ne.s32.totalorder %s163, %s177
      %p179 = scmp.eq.s32.totalorder %s27, 0
      %p180 = por %p178, %p179
      %s182 = sadd.s32 %s181, 1
      %p185 = scmp.eq.s32.totalorder %s21, 1
      %p186 = scmp.ne.s32.totalorder %s181, %s183
      %p187 = scmp.eq.s32.totalorder %s21, 0
      %p188 = por %p186, %p187
      %p189 = scmp.ne.s32.totalorder %s181, %s183
      %p190 = scmp.eq.s32.totalorder %s26, 1
      %p191 = por %p189, %p190
      %p192 = scmp.ne.s32.totalorder %s183, %s184
      %p193 = scmp.eq.s32.totalorder %s26, 0
      %p194 = por %p192, %p193
      %p195 = scmp.ne.s32.totalorder %s183, %s184
      %p196 = scmp.eq.s32.totalorder %s27, 1
      %p197 = por %p195, %p196
      %p199 = scmp.ne.s32.totalorder %s184, %s198
      %p200 = scmp.eq.s32.totalorder %s27, 0
      %p201 = por %p199, %p200
      %s203 = sadd.s32 %s202, 1
      %p206 = scmp.eq.s32.totalorder %s21, 1
      %p207 = scmp.ne.s32.totalorder %s202, %s204
      %p208 = scmp.eq.s32.totalorder %s21, 0
      %p209 = por %p207, %p208
      %p210 = scmp.ne.s32.totalorder %s202, %s204
      %p211 = scmp.eq.s32.totalorder %s26, 1
      %p212 = por %p210, %p211
      %p213 = scmp.ne.s32.totalorder %s204, %s205
      %p214 = scmp.eq.s32.totalorder %s26, 0
      %p215 = por %p213, %p214
      %p216 = scmp.ne.s32.totalorder %s204, %s205
      %p217 = scmp.eq.s32.totalorder %s27, 1
      %p218 = por %p216, %p217
      %p220 = scmp.ne.s32.totalorder %s205, %s219
      %p221 = scmp.eq.s32.totalorder %s27, 0
      %p222 = por %p220, %p221
      %s224 = sadd.s32 %s223, 1
      %p227 = scmp.eq.s32.totalorder %s21, 1
      %p228 = scmp.ne.s32.totalorder %s223, %s225
      %p229 = scmp.eq.s32.totalorder %s21, 0
      %p230 = por %p228, %p229
      %p231 = scmp.ne.s32.totalorder %s223, %s225
      %p232 = scmp.eq.s32.totalorder %s26, 1
      %p233 = por %p231, %p232
      %p234 = scmp.ne.s32.totalorder %s225, %s226
      %p235 = scmp.eq.s32.totalorder %s26, 0
      %p236 = por %p234, %p235
      %p237 = scmp.ne.s32.totalorder %s225, %s226
      %p238 = scmp.eq.s32.totalorder %s27, 1
      %p239 = por %p237, %p238
      %p241 = scmp.ne.s32.totalorder %s226, %s240
      %p242 = scmp.eq.s32.totalorder %s27, 0
      %p243 = por %p241, %p242
      %s245 = sadd.s32 %s244, 1
      %p248 = scmp.eq.s32.totalorder %s21, 1
      %p249 = scmp.ne.s32.totalorder %s244, %s246
      %p250 = scmp.eq.s32.totalorder %s21, 0
      %p251 = por %p249, %p250
      %p252 = scmp.ne.s32.totalorder %s244, %s246
      %p253 = scmp.eq.s32.totalorder %s26, 1
      %p254 = por %p252, %p253
      %p255 = scmp.ne.s32.totalorder %s246, %s247
      %p256 = scmp.eq.s32.totalorder %s26, 0
      %p257 = por %p255, %p256
      %p258 = scmp.ne.s32.totalorder %s246, %s247
      %p259 = scmp.eq.s32.totalorder %s27, 1
      %p260 = por %p258, %p259
      %p262 = scmp.ne.s32.totalorder %s247, %s261
      %p263 = scmp.eq.s32.totalorder %s27, 0
      %p264 = por %p262, %p263
      %s265 = ssub.s32 %s21, %s28
      %p266 = scmp.eq.s32.totalorder %s265, 0
      %s268 = sadd.s32 %s267, 1
      %s269 = scalar_select %p266, %s267, %s268
      %p272 = pneg %p266
      %p273 = scmp.eq.s32.totalorder %s21, 1
      %p274 = por %p272, %p273
      %p275 = scmp.ne.s32.totalorder %s267, %s270
      %p276 = scmp.eq.s32.totalorder %s21, 0
      %p277 = por %p275, %p276
      %p278 = scmp.ne.s32.totalorder %s267, %s270
      %p279 = scmp.eq.s32.totalorder %s26, 1
      %p280 = por %p278, %p279
      %p281 = scmp.ne.s32.totalorder %s270, %s271
      %p282 = scmp.eq.s32.totalorder %s26, 0
      %p283 = por %p281, %p282
      %p284 = scmp.ne.s32.totalorder %s270, %s271
      %p285 = scmp.eq.s32.totalorder %s27, 1
      %p286 = por %p284, %p285
      %p288 = scmp.ne.s32.totalorder %s271, %s287
      %p289 = scmp.eq.s32.totalorder %s27, 0
      %p290 = por %p288, %p289
      %p291 = scmp.le.s32.totalorder 1, %s21
      %p292 = scmp.lt.s32.totalorder %s21, 3
      %p293 = pnand %p291, %p292
      %p294 = pneg %p293
      // Predicated region
      $region9: #{tpu_custom_call.1} parent=5 // pred_check
        _
      $region10: #{tpu_custom_call.1} parent=5 // pred_check_branch
        %296 = sbr.rel (%p293) target = $region12
      $region11: #{tpu_custom_call.1} parent=5 // pred_region
        %s297 = ssub.s32 %s21, 1
        // Predicated region
        $region13: #{tpu_custom_call.1} parent=11 // pred_check
          %p298 = pneg %p42
        $region14: #{tpu_custom_call.1} parent=11 // pred_check_branch
          %300 = sbr.rel (%p298) target = $region16
        $region15: #{tpu_custom_call.1} parent=11 // pred_region
          %s302 = ssub.s32 16, 16
          %303 = vsyncadd [#allocation4], %s302
          %s305 = sshll.u32 %s0, 4
          %s306 = int_to_ptr.vmem [resolvable:$true] %s305
          %308 = dma.vmem_to_smem %s306, 16, [#allocation2], [#allocation4]
        $region16: #{tpu_custom_call.1} parent=11 // pred_fallthru
          _
        // Predicated region
        $region17: #{tpu_custom_call.1} parent=11 // pred_check
          %p309 = pneg %p63
        $region18: #{tpu_custom_call.1} parent=11 // pred_check_branch
          %311 = sbr.rel (%p309) target = $region20
        $region19: #{tpu_custom_call.1} parent=11 // pred_region
          _
        $region20: #{tpu_custom_call.1} parent=11 // pred_fallthru
          _
        // Predicated region
        $region21: #{tpu_custom_call.1} parent=11 // pred_check
          %p312 = pneg %p110
        $region22: #{tpu_custom_call.1} parent=11 // pred_check_branch
          %314 = sbr.rel (%p312) target = $region24
        $region23: #{tpu_custom_call.1} parent=11 // pred_region
          _
        $region24: #{tpu_custom_call.1} parent=11 // pred_fallthru
          _
        // Predicated region
        $region25: #{tpu_custom_call.1} parent=11 // pred_check
          %p315 = pneg %p131
        $region26: #{tpu_custom_call.1} parent=11 // pred_check_branch
          %317 = sbr.rel (%p315) target = $region28
        $region27: #{tpu_custom_call.1} parent=11 // pred_region
          _
        $region28: #{tpu_custom_call.1} parent=11 // pred_fallthru
          _
        // Predicated region
        $region29: #{tpu_custom_call.1} parent=11 // pred_check
          %p318 = pneg %p152
        $region30: #{tpu_custom_call.1} parent=11 // pred_check_branch
          %320 = sbr.rel (%p318) target = $region32
        $region31: #{tpu_custom_call.1} parent=11 // pred_region
          _
        $region32: #{tpu_custom_call.1} parent=11 // pred_fallthru
          _
        // Predicated region
        $region33: #{tpu_custom_call.1} parent=11 // pred_check
          %p321 = pneg %p173
        $region34: #{tpu_custom_call.1} parent=11 // pred_check_branch
          %323 = sbr.rel (%p321) target = $region36
        $region35: #{tpu_custom_call.1} parent=11 // pred_region
          _
        $region36: #{tpu_custom_call.1} parent=11 // pred_fallthru
          _
        // Predicated region
        $region37: #{tpu_custom_call.1} parent=11 // pred_check
          %p324 = pneg %p194
        $region38: #{tpu_custom_call.1} parent=11 // pred_check_branch
          %326 = sbr.rel (%p324) target = $region40
        $region39: #{tpu_custom_call.1} parent=11 // pred_region
          _
        $region40: #{tpu_custom_call.1} parent=11 // pred_fallthru
          _
        // Predicated region
        $region41: #{tpu_custom_call.1} parent=11 // pred_check
          %p327 = pneg %p215
        $region42: #{tpu_custom_call.1} parent=11 // pred_check_branch
          %329 = sbr.rel (%p327) target = $region44
        $region43: #{tpu_custom_call.1} parent=11 // pred_region
          _
        $region44: #{tpu_custom_call.1} parent=11 // pred_fallthru
          _
        // Predicated region
        $region45: #{tpu_custom_call.1} parent=11 // pred_check
          %p330 = pneg %p236
        $region46: #{tpu_custom_call.1} parent=11 // pred_check_branch
          %332 = sbr.rel (%p330) target = $region48
        $region47: #{tpu_custom_call.1} parent=11 // pred_region
          _
        $region48: #{tpu_custom_call.1} parent=11 // pred_fallthru
          _
        // Predicated region
        $region49: #{tpu_custom_call.1} parent=11 // pred_check
          %p333 = pneg %p257
        $region50: #{tpu_custom_call.1} parent=11 // pred_check_branch
          %335 = sbr.rel (%p333) target = $region52
        $region51: #{tpu_custom_call.1} parent=11 // pred_region
          _
        $region52: #{tpu_custom_call.1} parent=11 // pred_fallthru
          _
      $region12: #{tpu_custom_call.1} parent=5 // pred_fallthru
        _
      %p336 = scmp.lt.s32.totalorder %s21, 2
      // Predicated region
      $region53: #{tpu_custom_call.1} parent=5 // pred_check
        %p337 = pneg %p336
      $region54: #{tpu_custom_call.1} parent=5 // pred_check_branch
        %339 = sbr.rel (%p337) target = $region56
      $region55: #{tpu_custom_call.1} parent=5 // pred_region
        // Predicated region
        $region57: #{tpu_custom_call.1} parent=55 // pred_check
          %p340 = pneg %p83
        $region58: #{tpu_custom_call.1} parent=55 // pred_check_branch
          %342 = sbr.rel (%p340) target = $region60
        $region59: #{tpu_custom_call.1} parent=55 // pred_region
          %s343 = sand.u32 %s73, 1
          %s344 = sand.u32 %s73, 1
          %s345 = smul.addr %s344, 16
          %s346 = scalar_lea.vmem [#allocation5], %s345
          %s347 = smul.addr %s21, 8
          %s348 = scalar_lea.vmem %s2, %s347
          // Predicated region
          $region61: #{tpu_custom_call.1} parent=59 // pred_check
            _
          $region62: #{tpu_custom_call.1} parent=59 // pred_check_branch
            %350 = sbr.rel (0) target = $region64
          $region63: #{tpu_custom_call.1} parent=59 // pred_region
            // Predicated region
            $region65: #{tpu_custom_call.1} parent=63 // pred_check
              _
            $region66: #{tpu_custom_call.1} parent=63 // pred_check_branch
              %352 = sbr.rel (0) target = $region68
            $region67: #{tpu_custom_call.1} parent=63 // pred_region
              // Predicated region
              $region80: #{tpu_custom_call.1} parent=67 // pred_check
                _
              $region81: #{tpu_custom_call.1} parent=67 // pred_check_branch
                %370 = sbr.rel (0) target = $region83
              $region82: #{tpu_custom_call.1} parent=67 // pred_region
                loop: start=0, step=1, limit=1
                $region84: #{tpu_custom_call.1} parent=82 // loop_pre_header
                  _
                $region85: #{tpu_custom_call.1} parent=82 // loop_header
                  %s372 = sphi 0, %s376
                  %p373 = scmp.ge.s32.totalorder %s372, 1
                  %s377 = sphi %s348, %s348
                  %s378 = sphi %s346, %s346
                $region86: #{tpu_custom_call.1} parent=82 // loop_header_branch
                  %375 = sbr.rel (%p373) target = $region90
                $region87: #{tpu_custom_call.1} parent=82 // loop_body
                  %v379 = vld [vmem:[%s377] sm:$0xff]
                  %380 = vst [vmem:[%s378] sm:$0xff] %v379
                  %v381 = vld [vmem:[%s377 + $0x10] sm:$0xff]
                  %382 = vst [vmem:[%s378 + $0x8] sm:$0xff] %v381
                $region88: #{tpu_custom_call.1} parent=82 // loop_footer
                  %s376 = sadd.s32 1, %s372
                $region89: #{tpu_custom_call.1} parent=82 // loop_footer_branch
                  %371 = sbr.rel target = $region85
                $region90: #{tpu_custom_call.1} parent=82 // loop_exit
                  _
              $region83: #{tpu_custom_call.1} parent=67 // pred_fallthru
                _
              // Predicated region
              $region91: #{tpu_custom_call.1} parent=67 // pred_check
                _
              $region92: #{tpu_custom_call.1} parent=67 // pred_check_branch
                %384 = sbr.rel target = $region94
              $region93: #{tpu_custom_call.1} parent=67 // pred_region
                _
              $region94: #{tpu_custom_call.1} parent=67 // pred_fallthru
                _
            $region68: #{tpu_custom_call.1} parent=63 // pred_fallthru
              _
            // Predicated region
            $region69: #{tpu_custom_call.1} parent=63 // pred_check
              _
            $region70: #{tpu_custom_call.1} parent=63 // pred_check_branch
              %354 = sbr.rel target = $region72
            $region71: #{tpu_custom_call.1} parent=63 // pred_region
              %s356 = ssub.s32 256, 1
              loop: start=0, step=1, limit=1
              $region73: #{tpu_custom_call.1} parent=71 // loop_pre_header
                _
              $region74: #{tpu_custom_call.1} parent=71 // loop_header
                %s358 = sphi 0, %s362
                %p359 = scmp.ge.s32.totalorder %s358, 1
                %s363 = sphi %s348, %s348
                %s364 = sphi %s346, %s346
              $region75: #{tpu_custom_call.1} parent=71 // loop_header_branch
                %361 = sbr.rel (%p359) target = $region79
              $region76: #{tpu_custom_call.1} parent=71 // loop_body
                %v365 = vld [vmem:[%s363] sm:%s356]
                %366 = vst [vmem:[%s364] sm:%s356] %v365
                %v367 = vld [vmem:[%s363 + $0x10] sm:%s356]
                %368 = vst [vmem:[%s364 + $0x8] sm:%s356] %v367
              $region77: #{tpu_custom_call.1} parent=71 // loop_footer
                %s362 = sadd.s32 1, %s358
              $region78: #{tpu_custom_call.1} parent=71 // loop_footer_branch
                %357 = sbr.rel target = $region74
              $region79: #{tpu_custom_call.1} parent=71 // loop_exit
                _
            $region72: #{tpu_custom_call.1} parent=63 // pred_fallthru
              _
          $region64: #{tpu_custom_call.1} parent=59 // pred_fallthru
            _
          %385 = vnop
        $region60: #{tpu_custom_call.1} parent=55 // pred_fallthru
          _
      $region56: #{tpu_custom_call.1} parent=5 // pred_fallthru
        _
      %p386 = scmp.le.s32.totalorder 1, %s21
      %p387 = scmp.lt.s32.totalorder %s21, 3
      %p388 = pnand %p386, %p387
      %p389 = pneg %p388
      // Predicated region
      $region95: #{tpu_custom_call.1} parent=5 // pred_check
        _
      $region96: #{tpu_custom_call.1} parent=5 // pred_check_branch
        %391 = sbr.rel (%p388) target = $region98
      $region97: #{tpu_custom_call.1} parent=5 // pred_region
        %s392 = ssub.s32 %s21, 1
        // Predicated region
        $region99: #{tpu_custom_call.1} parent=97 // pred_check
          %p393 = pneg %p42
        $region100: #{tpu_custom_call.1} parent=97 // pred_check_branch
          %395 = sbr.rel (%p393) target = $region102
        $region101: #{tpu_custom_call.1} parent=97 // pred_region
          %396 = dma.done [#allocation4], 16
        $region102: #{tpu_custom_call.1} parent=97 // pred_fallthru
          _
        %s397 = sand.u32 %s76, 1
        %s398 = sand.u32 %s76, 1
        %s399 = smul.addr %s398, 16
        %s400 = scalar_lea.vmem [#allocation5], %s399
        // Predicated region
        $region103: #{tpu_custom_call.1} parent=97 // pred_check
          %p401 = pneg %p89
        $region104: #{tpu_custom_call.1} parent=97 // pred_check_branch
          %403 = sbr.rel (%p401) target = $region106
        $region105: #{tpu_custom_call.1} parent=97 // pred_region
          _
        $region106: #{tpu_custom_call.1} parent=97 // pred_fallthru
          _
        %404 = sfence
        %p405 = pneg %p42
        %p406 = pneg %p39
        %p407 = pneg %p63
        %p408 = pneg %p60
        %s409 = sand.u32 %s76, 1
        %s410 = sand.u32 %s76, 1
        %s411 = smul.addr %s410, 16
        %s412 = scalar_lea.vmem [#allocation5], %s411
        %p413 = pneg %p89
        %p414 = pneg %p86
        %p415 = pneg %p110
        %p416 = pneg %p107
        %p417 = pneg %p131
        %p418 = pneg %p128
        %p419 = pneg %p152
        %p420 = pneg %p149
        %p421 = pneg %p173
        %p422 = pneg %p170
        %p423 = pneg %p194
        %p424 = pneg %p191
        %p425 = pneg %p215
        %p426 = pneg %p212
        %p427 = pneg %p236
        %p428 = pneg %p233
        %p429 = pneg %p257
        %p430 = pneg %p254
        %p431 = pneg %p283
        %p432 = pneg %p280
        %s433 = sand.u32 %s270, 1
        %s434 = scalar_lea.sflag [#allocation3], %s433
        %s435 = sand.u32 %s270, 1
        %s436 = smul.addr %s435, 16
        %s437 = scalar_lea.vmem [#allocation6], %s436
        %s439 = sld [smem:[#allocation2]]
        %s440 = sld [smem:[#allocation2 + $0x1]]
        %s441 = sld [smem:[#allocation2 + $0x2]]
        %v442 = vld [vmem:[%s1] sm:$0x1]
        %v443 = vadd.s32 %v442, 4294967293
        %vm444 = vcmp.ge.s32.totalorder %v443, 0
        %vm445 = vcmp.lt.s32.totalorder %v443, 32
        %vm446 = vmand %vm444, %vm445
        %v447 = vadd.s32 %v442, 4294967294
        %vm448 = vcmp.ge.s32.totalorder %v447, 0
        %vm449 = vcmp.lt.s32.totalorder %v447, 32
        %vm450 = vmand %vm448, %vm449
        %v451 = vadd.s32 %v442, 4294967295
        %vm452 = vcmp.ge.s32.totalorder %v451, 0
        %vm453 = vcmp.lt.s32.totalorder %v451, 32
        %vm454 = vmand %vm452, %vm453
        %v455 = vadd.s32 %v442, 1
        %vm456 = vcmp.ge.s32.totalorder %v455, 0
        %vm457 = vcmp.lt.s32.totalorder %v455, 32
        %vm458 = vmand %vm456, %vm457
        %v459 = vadd.s32 %v442, 2
        %vm460 = vcmp.ge.s32.totalorder %v459, 0
        %vm461 = vcmp.lt.s32.totalorder %v459, 32
        %vm462 = vmand %vm460, %vm461
        %v463 = vadd.s32 %v442, 3
        %vm464 = vcmp.ge.s32.totalorder %v463, 0
        %vm465 = vcmp.lt.s32.totalorder %v463, 32
        %vm466 = vmand %vm464, %vm465
        %vm467 = vcmp.lt.s32.totalorder %v442, 32
        %v468 = vld [vmem:[%s400] sm:$0xff]
        %v469 = vld [vmem:[%s400 + $0x8] sm:$0xff]
        %v470 = vld [vmem:[%s3] sm:$0xf]
        %v471 = vld [vmem:[%s3 + $0x4] sm:$0xf]
        %v472 = vld [vmem:[%s4] sm:$0xff]
        %v473 = vld [vmem:[%s4 + $0x8] sm:$0xff]
        %476 = vrot.lane.b32.xlu0 %v468, 3
        %v477 = vpop.permute.xlu0 %476
        %478 = vrot.lane.b32.xlu0 %v469, 3
        %v479 = vpop.permute.xlu0 %478
        %v482 = vsel %vm446, 1, 0
        %v483 = vlaneseq
        %v484 = vshrl.u32 %v483, 7
        %v485 = vsub.s32 0, %v484
        %v486 = vrot.slane %v482, %v485
        %vm487 = vcmp.eq.s32.totalorder %v486, 1
        %v488 = vsel %vm487, %v477, 0.0
        %v489 = vsel %vm487, %v479, 0.0
        %490 = vrot.lane.b32.xlu0 %v468, 2
        %v491 = vpop.permute.xlu0 %490
        %492 = vrot.lane.b32.xlu0 %v469, 2
        %v493 = vpop.permute.xlu0 %492
        %vm496 = vcmask 15360
        %v497 = vsel %vm450, 1, 0
        %v498 = vlaneseq
        %v499 = vshrl.u32 %v498, 7
        %v500 = vsub.s32 0, %v499
        %v501 = vrot.slane %v497, %v500
        %vm502 = vcmp.eq.s32.totalorder %v501, 1
        %v503 = vsel %vm502, %v491, 0.0
        %v504 = vsel %vm502, %v493, 0.0
        %505 = vrot.lane.b32.xlu0 %v468, 1
        %v506 = vpop.permute.xlu0 %505
        %507 = vrot.lane.b32.xlu0 %v469, 1
        %v508 = vpop.permute.xlu0 %507
        %v511 = vsel %vm454, 1, 0
        %v512 = vlaneseq
        %v513 = vshrl.u32 %v512, 7
        %v514 = vsub.s32 0, %v513
        %v515 = vrot.slane %v511, %v514
        %vm516 = vcmp.eq.s32.totalorder %v515, 1
        %v517 = vsel %vm516, %v506, 0.0
        %v518 = vsel %vm516, %v508, 0.0
        %519 = vrot.lane.b32.xlu0 %v468, 127
        %v520 = vpop.permute.xlu0 %519
        %521 = vrot.lane.b32.xlu0 %v469, 127
        %v522 = vpop.permute.xlu0 %521
        %v525 = vsel %vm458, 1, 0
        %v526 = vlaneseq
        %v527 = vshrl.u32 %v526, 7
        %v528 = vsub.s32 0, %v527
        %v529 = vrot.slane %v525, %v528
        %vm530 = vcmp.eq.s32.totalorder %v529, 1
        %v531 = vsel %vm530, %v520, 0.0
        %v532 = vsel %vm530, %v522, 0.0
        %533 = vrot.lane.b32.xlu0 %v468, 126
        %v534 = vpop.permute.xlu0 %533
        %535 = vrot.lane.b32.xlu0 %v469, 126
        %v536 = vpop.permute.xlu0 %535
        %v539 = vsel %vm462, 1, 0
        %v540 = vlaneseq
        %v541 = vshrl.u32 %v540, 7
        %v542 = vsub.s32 0, %v541
        %v543 = vrot.slane %v539, %v542
        %vm544 = vcmp.eq.s32.totalorder %v543, 1
        %v545 = vsel %vm544, %v534, 0.0
        %v546 = vsel %vm544, %v536, 0.0
        %547 = vrot.lane.b32.xlu0 %v468, 125
        %v548 = vpop.permute.xlu0 %547
        %549 = vrot.lane.b32.xlu0 %v469, 125
        %v550 = vpop.permute.xlu0 %549
        %v553 = vsel %vm466, 1, 0
        %v554 = vlaneseq
        %v555 = vshrl.u32 %v554, 7
        %v556 = vsub.s32 0, %v555
        %v557 = vrot.slane %v553, %v556
        %vm558 = vcmp.eq.s32.totalorder %v557, 1
        %v559 = vsel %vm558, %v548, 0.0
        %v560 = vsel %vm558, %v550, 0.0
        %v561 = vpack.c.bf16 %v489, %v488
        %v562 = vpack.c.bf16 %v504, %v503
        %v563 = vpack.c.bf16 %v518, %v517
        %v564 = vpack.c.bf16 %v469, %v468
        %v565 = vpack.c.bf16 %v532, %v531
        %v566 = vpack.c.bf16 %v546, %v545
        %v567 = vpack.c.bf16 %v560, %v559
        %569 = vset.pattern.permute.xlu0 0
        %570 = vperm.xlu0 %569, %v472
        %v571 = vpop.permute.xlu0 %570
        %574 = vset.pattern.permute.xlu0 0
        %575 = vperm.xlu0 %574, %v473
        %v576 = vpop.permute.xlu0 %575
        %v580 = vunpack.c.l.b16 %v470
        %v581 = vunpack.c.l.b16 %v471
        %v582 = vpack.c.b16 %v581, %v580
        %vm583 = vcmask 916480
        %v585 = vsel %vm583, %v582, 0
        %587 = vmatprep.subr.bf16.mxu0 0
        %588 = vmatpush1.bf16.msra.mxu0 0
        %589 = vmatprep.subr.bf16.mxu0 0
        %590 = vmatpush1.bf16.msra.mxu0 %v567
        %591 = vmatprep.subr.bf16.mxu0 0
        %592 = vmatpush1.bf16.msra.mxu0 %v566
        %593 = vmatprep.subr.bf16.mxu0 0
        %594 = vmatpush1.bf16.msra.mxu0 %v565
        %595 = vmatprep.subr.bf16.mxu0 0
        %596 = vmatpush1.bf16.msra.mxu0 %v564
        %597 = vmatprep.subr.bf16.mxu0 0
        %598 = vmatpush1.bf16.msra.mxu0 %v563
        %599 = vmatprep.subr.bf16.mxu0 0
        %600 = vmatpush1.bf16.msra.mxu0 %v562
        %601 = vmatprep.subr.bf16.mxu0 0
        %602 = vmatpush1.bf16.msra.mxu0 %v561
        %603 = vmatprep.subr.bf16.mxu0 0
        %604 = vmatpush2.bf16.msra.mxu0 0
        %605 = vmatprep.subr.bf16.mxu0 0
        %606 = vmatpush2.bf16.msra.mxu0 0
        %607 = vmatprep.subr.bf16.mxu0 0
        %608 = vmatpush2.bf16.msra.mxu0 0
        %609 = vmatprep.subr.bf16.mxu0 0
        %610 = vmatpush2.bf16.msra.mxu0 0
        %611 = vmatprep.subr.bf16.mxu0 0
        %612 = vmatpush2.bf16.msra.mxu0 0
        %613 = vmatprep.subr.bf16.mxu0 0
        %614 = vmatpush2.bf16.msra.mxu0 0
        %615 = vmatprep.subr.bf16.mxu0 0
        %616 = vmatpush2.bf16.msra.mxu0 0
        %617 = vmatprep.subr.bf16.mxu0 0
        %618 = vmatpush2.bf16.msra.mxu0 0
        %619 = vmatprep.mubr.bf16.mxu0 0
        %620 = vmatmul.mubr.bf16.gmra.mxu0 %v585
        %v621 = vpop.f32.mrf.mxu0
        %v622 = vadd.f32 %v571, %v621
        %v623 = vpop.f32.mrf.mxu0
        %v624 = vpop.f32.mrf.mxu0
        %v625 = vadd.f32 %v576, %v624
        %v626 = vpop.f32.mrf.mxu0
        %627 = vdwg.mxu0
        %v628 = vsel %vm467, 1, 0
        %v629 = vlaneseq
        %v630 = vshrl.u32 %v629, 7
        %v631 = vsub.s32 0, %v630
        %v632 = vrot.slane %v628, %v631
        %vm633 = vcmp.eq.s32.totalorder %v632, 1
        %v634 = vsel %vm633, %v622, 0.0
        %v635 = vsel %vm633, %v625, 0.0
        %636 = vadd.xlane.f32.xlu0 %v634
        %v637 = vpop.xlane.xlu0 %636
        %638 = vadd.xlane.f32.xlu0 %v635
        %v639 = vpop.xlane.xlu0 %638
        %v640 = vmul.f32 %v634, %v634
        %v641 = vmul.f32 %v635, %v635
        %642 = vadd.xlane.f32.xlu0 %v640
        %v643 = vpop.xlane.xlu0 %642
        %644 = vadd.xlane.f32.xlu0 %v641
        %v645 = vpop.xlane.xlu0 %644
        %v646 = vmul.f32 %v637, 0.03125
        %v647 = vmul.f32 %v639, 0.03125
        %v648 = vmul.f32 %v643, 0.03125
        %v649 = vmul.f32 %v645, 0.03125
        %v650 = vmul.f32 %v646, %v646
        %v651 = vmul.f32 %v647, %v647
        %v652 = vsub.f32 %v648, %v650
        %v653 = vsub.f32 %v649, %v651
        %v654 = vmax.f32 %v652, 0.0
        %v655 = vmax.f32 %v653, 0.0
        %v656 = vadd.f32 %v654, 1e-05
        %v657 = vadd.f32 %v655, 1e-05
        %v658 = vrsqrt.pop %v656
        %v659 = vrsqrt.pop %v657
        %v660 = vsub.f32 0.0, %v646
        %v661 = vsub.f32 0.0, %v647
        %v662 = vmul.f32 %v660, %v658
        %v663 = vmul.f32 %v661, %v659
        %v664 = vmul.f32 %v622, %v658
        %v665 = vmul.f32 %v625, %v659
        %v666 = vadd.f32 %v664, %v662
        %v667 = vadd.f32 %v665, %v663
        %vm668 = vcmp.gt.f32.partialorder %v666, 0.0
        %vm669 = vcmp.gt.f32.partialorder %v667, 0.0
        %v670 = vstv %s439
        %v671 = vmul.f32 %v670, %v666
        %v672 = vmul.f32 %v670, %v667
        %v673 = vsel %vm668, %v666, %v671
        %v674 = vsel %vm669, %v667, %v672
        %v675 = vsel %vm633, %v673, 0.0
        %v676 = vsel %vm633, %v674, 0.0
        %v677 = vld [vmem:[%s5] sm:$0xf]
        %v678 = vld [vmem:[%s5 + $0x4] sm:$0xf]
        %v679 = vld [vmem:[%s6] sm:$0xff]
        %v680 = vld [vmem:[%s6 + $0x8] sm:$0xff]
        %683 = vrot.lane.b32.xlu0 %v675, 3
        %v684 = vpop.permute.xlu0 %683
        %685 = vrot.lane.b32.xlu0 %v676, 3
        %v686 = vpop.permute.xlu0 %685
        %v689 = vsel %vm487, %v684, 0.0
        %v690 = vsel %vm487, %v686, 0.0
        %691 = vrot.lane.b32.xlu0 %v675, 2
        %v692 = vpop.permute.xlu0 %691
        %693 = vrot.lane.b32.xlu0 %v676, 2
        %v694 = vpop.permute.xlu0 %693
        %v697 = vsel %vm502, %v692, 0.0
        %v698 = vsel %vm502, %v694, 0.0
        %699 = vrot.lane.b32.xlu0 %v675, 1
        %v700 = vpop.permute.xlu0 %699
        %701 = vrot.lane.b32.xlu0 %v676, 1
        %v702 = vpop.permute.xlu0 %701
        %v705 = vsel %vm516, %v700, 0.0
        %v706 = vsel %vm516, %v702, 0.0
        %707 = vrot.lane.b32.xlu0 %v675, 127
        %v708 = vpop.permute.xlu0 %707
        %709 = vrot.lane.b32.xlu0 %v676, 127
        %v710 = vpop.permute.xlu0 %709
        %v713 = vsel %vm530, %v708, 0.0
        %v714 = vsel %vm530, %v710, 0.0
        %715 = vrot.lane.b32.xlu0 %v675, 126
        %v716 = vpop.permute.xlu0 %715
        %717 = vrot.lane.b32.xlu0 %v676, 126
        %v718 = vpop.permute.xlu0 %717
        %v721 = vsel %vm544, %v716, 0.0
        %v722 = vsel %vm544, %v718, 0.0
        %723 = vrot.lane.b32.xlu0 %v675, 125
        %v724 = vpop.permute.xlu0 %723
        %725 = vrot.lane.b32.xlu0 %v676, 125
        %v726 = vpop.permute.xlu0 %725
        %v729 = vsel %vm558, %v724, 0.0
        %v730 = vsel %vm558, %v726, 0.0
        %v731 = vpack.c.bf16 %v690, %v689
        %v732 = vpack.c.bf16 %v698, %v697
        %v733 = vpack.c.bf16 %v706, %v705
        %v734 = vpack.c.bf16 %v676, %v675
        %v735 = vpack.c.bf16 %v714, %v713
        %v736 = vpack.c.bf16 %v722, %v721
        %v737 = vpack.c.bf16 %v730, %v729
        %739 = vset.pattern.permute.xlu0 0
        %740 = vperm.xlu0 %739, %v679
        %v741 = vpop.permute.xlu0 %740
        %744 = vset.pattern.permute.xlu0 0
        %745 = vperm.xlu0 %744, %v680
        %v746 = vpop.permute.xlu0 %745
        %v750 = vunpack.c.l.b16 %v677
        %v751 = vunpack.c.l.b16 %v678
        %v752 = vpack.c.b16 %v751, %v750
        %v754 = vsel %vm583, %v752, 0
        %756 = vmatprep.subr.bf16.mxu0 0
        %757 = vmatpush1.bf16.msra.mxu0 0
        %758 = vmatprep.subr.bf16.mxu0 0
        %759 = vmatpush1.bf16.msra.mxu0 %v737
        %760 = vmatprep.subr.bf16.mxu0 0
        %761 = vmatpush1.bf16.msra.mxu0 %v736
        %762 = vmatprep.subr.bf16.mxu0 0
        %763 = vmatpush1.bf16.msra.mxu0 %v735
        %764 = vmatprep.subr.bf16.mxu0 0
        %765 = vmatpush1.bf16.msra.mxu0 %v734
        %766 = vmatprep.subr.bf16.mxu0 0
        %767 = vmatpush1.bf16.msra.mxu0 %v733
        %768 = vmatprep.subr.bf16.mxu0 0
        %769 = vmatpush1.bf16.msra.mxu0 %v732
        %770 = vmatprep.subr.bf16.mxu0 0
        %771 = vmatpush1.bf16.msra.mxu0 %v731
        %772 = vmatprep.subr.bf16.mxu0 0
        %773 = vmatpush2.bf16.msra.mxu0 0
        %774 = vmatprep.subr.bf16.mxu0 0
        %775 = vmatpush2.bf16.msra.mxu0 0
        %776 = vmatprep.subr.bf16.mxu0 0
        %777 = vmatpush2.bf16.msra.mxu0 0
        %778 = vmatprep.subr.bf16.mxu0 0
        %779 = vmatpush2.bf16.msra.mxu0 0
        %780 = vmatprep.subr.bf16.mxu0 0
        %781 = vmatpush2.bf16.msra.mxu0 0
        %782 = vmatprep.subr.bf16.mxu0 0
        %783 = vmatpush2.bf16.msra.mxu0 0
        %784 = vmatprep.subr.bf16.mxu0 0
        %785 = vmatpush2.bf16.msra.mxu0 0
        %786 = vmatprep.subr.bf16.mxu0 0
        %787 = vmatpush2.bf16.msra.mxu0 0
        %788 = vmatprep.mubr.bf16.mxu0 0
        %789 = vmatmul.mubr.bf16.gmra.mxu0 %v754
        %v790 = vpop.f32.mrf.mxu0
        %v791 = vadd.f32 %v741, %v790
        %v792 = vpop.f32.mrf.mxu0
        %v793 = vpop.f32.mrf.mxu0
        %v794 = vadd.f32 %v746, %v793
        %v795 = vpop.f32.mrf.mxu0
        %796 = vdwg.mxu0
        %v797 = vsel %vm633, %v791, 0.0
        %v798 = vsel %vm633, %v794, 0.0
        %799 = vadd.xlane.f32.xlu0 %v797
        %v800 = vpop.xlane.xlu0 %799
        %801 = vadd.xlane.f32.xlu0 %v798
        %v802 = vpop.xlane.xlu0 %801
        %v803 = vmul.f32 %v797, %v797
        %v804 = vmul.f32 %v798, %v798
        %805 = vadd.xlane.f32.xlu0 %v803
        %v806 = vpop.xlane.xlu0 %805
        %807 = vadd.xlane.f32.xlu0 %v804
        %v808 = vpop.xlane.xlu0 %807
        %v809 = vmul.f32 %v800, 0.03125
        %v810 = vmul.f32 %v802, 0.03125
        %v811 = vmul.f32 %v806, 0.03125
        %v812 = vmul.f32 %v808, 0.03125
        %v813 = vmul.f32 %v809, %v809
        %v814 = vmul.f32 %v810, %v810
        %v815 = vsub.f32 %v811, %v813
        %v816 = vsub.f32 %v812, %v814
        %v817 = vmax.f32 %v815, 0.0
        %v818 = vmax.f32 %v816, 0.0
        %v819 = vadd.f32 %v817, 1e-05
        %v820 = vadd.f32 %v818, 1e-05
        %v821 = vrsqrt.pop %v819
        %v822 = vrsqrt.pop %v820
        %v823 = vsub.f32 0.0, %v809
        %v824 = vsub.f32 0.0, %v810
        %v825 = vmul.f32 %v823, %v821
        %v826 = vmul.f32 %v824, %v822
        %v827 = vmul.f32 %v791, %v821
        %v828 = vmul.f32 %v794, %v822
        %v829 = vadd.f32 %v827, %v825
        %v830 = vadd.f32 %v828, %v826
        %vm831 = vcmp.gt.f32.partialorder %v829, 0.0
        %vm832 = vcmp.gt.f32.partialorder %v830, 0.0
        %v833 = vstv %s440
        %v834 = vmul.f32 %v833, %v829
        %v835 = vmul.f32 %v833, %v830
        %v836 = vsel %vm831, %v829, %v834
        %v837 = vsel %vm832, %v830, %v835
        %v838 = vsel %vm633, %v836, 0.0
        %v839 = vsel %vm633, %v837, 0.0
        %840 = vadd.xlane.f32.xlu0 %v838
        %v841 = vpop.xlane.xlu0 %840
        %842 = vadd.xlane.f32.xlu0 %v839
        %v843 = vpop.xlane.xlu0 %842
        %v844 = vmul.f32 %v841, 0.03125
        %v845 = vmul.f32 %v843, 0.03125
        %v846 = vld [vmem:[%s7] sm:$0x3]
        %v847 = vld [vmem:[%s8] sm:$0x3]
        %vm848 = vcmask 130048
        %v850 = vsel %vm848, %v846, 0
        %852 = vmatprep.subr.mxu0 0.0
        %853 = vmatpush1.msra.mxu0 0.0
        %854 = vmatprep.subr.mxu0 0.0
        %855 = vmatpush1.msra.mxu0 0.0
        %856 = vmatprep.subr.mxu0 0.0
        %857 = vmatpush1.msra.mxu0 0.0
        %858 = vmatprep.subr.mxu0 0.0
        %859 = vmatpush1.msra.mxu0 0.0
        %860 = vmatprep.subr.mxu0 0.0
        %861 = vmatpush1.msra.mxu0 0.0
        %862 = vmatprep.subr.mxu0 0.0
        %863 = vmatpush1.msra.mxu0 0.0
        %864 = vmatprep.subr.mxu0 0.0
        %865 = vmatpush1.msra.mxu0 0.0
        %866 = vmatprep.subr.mxu0 0.0
        %867 = vmatpush1.msra.mxu0 0.0
        %868 = vmatprep.subr.mxu0 0.0
        %869 = vmatpush1.msra.mxu0 0.0
        %870 = vmatprep.subr.mxu0 0.0
        %871 = vmatpush1.msra.mxu0 0.0
        %872 = vmatprep.subr.mxu0 0.0
        %873 = vmatpush1.msra.mxu0 0.0
        %874 = vmatprep.subr.mxu0 0.0
        %875 = vmatpush1.msra.mxu0 0.0
        %876 = vmatprep.subr.mxu0 0.0
        %877 = vmatpush1.msra.mxu0 0.0
        %878 = vmatprep.subr.mxu0 0.0
        %879 = vmatpush1.msra.mxu0 0.0
        %880 = vmatprep.subr.mxu0 0.0
        %881 = vmatpush1.msra.mxu0 %v845
        %882 = vmatprep.subr.mxu0 0.0
        %883 = vmatpush1.msra.mxu0 %v844
        %884 = vmatprep.subr.mxu0 0.0
        %885 = vmatpush2.msra.mxu0 0.0
        %886 = vmatprep.subr.mxu0 0.0
        %887 = vmatpush2.msra.mxu0 0.0
        %888 = vmatprep.subr.mxu0 0.0
        %889 = vmatpush2.msra.mxu0 0.0
        %890 = vmatprep.subr.mxu0 0.0
        %891 = vmatpush2.msra.mxu0 0.0
        %892 = vmatprep.subr.mxu0 0.0
        %893 = vmatpush2.msra.mxu0 0.0
        %894 = vmatprep.subr.mxu0 0.0
        %895 = vmatpush2.msra.mxu0 0.0
        %896 = vmatprep.subr.mxu0 0.0
        %897 = vmatpush2.msra.mxu0 0.0
        %898 = vmatprep.subr.mxu0 0.0
        %899 = vmatpush2.msra.mxu0 0.0
        %900 = vmatprep.subr.mxu0 0.0
        %901 = vmatpush2.msra.mxu0 0.0
        %902 = vmatprep.subr.mxu0 0.0
        %903 = vmatpush2.msra.mxu0 0.0
        %904 = vmatprep.subr.mxu0 0.0
        %905 = vmatpush2.msra.mxu0 0.0
        %906 = vmatprep.subr.mxu0 0.0
        %907 = vmatpush2.msra.mxu0 0.0
        %908 = vmatprep.subr.mxu0 0.0
        %909 = vmatpush2.msra.mxu0 0.0
        %910 = vmatprep.subr.mxu0 0.0
        %911 = vmatpush2.msra.mxu0 0.0
        %912 = vmatprep.subr.mxu0 0.0
        %913 = vmatpush2.msra.mxu0 0.0
        %914 = vmatprep.subr.mxu0 0.0
        %915 = vmatpush2.msra.mxu0 0.0
        %916 = vmatprep.mubr.f32.mxu0 0.0
        %917 = vmatmul.mubr.f32.gmra.mxu0 %v850
        %v918 = vpop.f32.mrf.mxu0
        %v919 = vadd.f32 %v847, %v918
        %v920 = vpop.f32.mrf.mxu0
        %921 = vdwg.mxu0
        %vm922 = vcmp.gt.f32.partialorder %v919, 0.0
        %v923 = vstv %s441
        %v924 = vmul.f32 %v923, %v919
        %v925 = vsel %vm922, %v919, %v924
        %v926 = vld [vmem:[%s9] sm:$0xff]
        %v927 = vld [vmem:[%s9 + $0x8] sm:$0xff]
        %v928 = vld [vmem:[%s10] sm:$0xff]
        %v929 = vld [vmem:[%s10 + $0x8] sm:$0xff]
        %v931 = vsel %vm496, %v926, 0
        %v934 = vsel %vm496, %v927, 0
        %vm936 = vcmask 1041408
        %v938 = vsel %vm936, %v925, 0
        %940 = vmatprep.subr.mxu0 0.0
        %941 = vmatpush1.msra.mxu0 0.0
        %942 = vmatprep.subr.mxu0 0.0
        %943 = vmatpush1.msra.mxu0 0.0
        %944 = vmatprep.subr.mxu0 0.0
        %945 = vmatpush1.msra.mxu0 0.0
        %946 = vmatprep.subr.mxu0 0.0
        %947 = vmatpush1.msra.mxu0 0.0
        %948 = vmatprep.subr.mxu0 0.0
        %949 = vmatpush1.msra.mxu0 0.0
        %950 = vmatprep.subr.mxu0 0.0
        %951 = vmatpush1.msra.mxu0 0.0
        %952 = vmatprep.subr.mxu0 0.0
        %953 = vmatpush1.msra.mxu0 0.0
        %954 = vmatprep.subr.mxu0 0.0
        %955 = vmatpush1.msra.mxu0 0.0
        %956 = vmatprep.subr.mxu0 0.0
        %957 = vmatpush1.msra.mxu0 0.0
        %958 = vmatprep.subr.mxu0 0.0
        %959 = vmatpush1.msra.mxu0 0.0
        %960 = vmatprep.subr.mxu0 0.0
        %961 = vmatpush1.msra.mxu0 0.0
        %962 = vmatprep.subr.mxu0 0.0
        %963 = vmatpush1.msra.mxu0 0.0
        %964 = vmatprep.subr.mxu0 0.0
        %965 = vmatpush1.msra.mxu0 0.0
        %966 = vmatprep.subr.mxu0 0.0
        %967 = vmatpush1.msra.mxu0 0.0
        %968 = vmatprep.subr.mxu0 0.0
        %969 = vmatpush1.msra.mxu0 0.0
        %970 = vmatprep.subr.mxu0 0.0
        %971 = vmatpush1.msra.mxu0 %v938
        %972 = vmatprep.subr.mxu0 0.0
        %973 = vmatpush2.msra.mxu0 0.0
        %974 = vmatprep.subr.mxu0 0.0
        %975 = vmatpush2.msra.mxu0 0.0
        %976 = vmatprep.subr.mxu0 0.0
        %977 = vmatpush2.msra.mxu0 0.0
        %978 = vmatprep.subr.mxu0 0.0
        %979 = vmatpush2.msra.mxu0 0.0
        %980 = vmatprep.subr.mxu0 0.0
        %981 = vmatpush2.msra.mxu0 0.0
        %982 = vmatprep.subr.mxu0 0.0
        %983 = vmatpush2.msra.mxu0 0.0
        %984 = vmatprep.subr.mxu0 0.0
        %985 = vmatpush2.msra.mxu0 0.0
        %986 = vmatprep.subr.mxu0 0.0
        %987 = vmatpush2.msra.mxu0 0.0
        %988 = vmatprep.subr.mxu0 0.0
        %989 = vmatpush2.msra.mxu0 0.0
        %990 = vmatprep.subr.mxu0 0.0
        %991 = vmatpush2.msra.mxu0 0.0
        %992 = vmatprep.subr.mxu0 0.0
        %993 = vmatpush2.msra.mxu0 0.0
        %994 = vmatprep.subr.mxu0 0.0
        %995 = vmatpush2.msra.mxu0 0.0
        %996 = vmatprep.subr.mxu0 0.0
        %997 = vmatpush2.msra.mxu0 0.0
        %998 = vmatprep.subr.mxu0 0.0
        %999 = vmatpush2.msra.mxu0 0.0
        %1000 = vmatprep.subr.mxu0 0.0
        %1001 = vmatpush2.msra.mxu0 0.0
        %1002 = vmatprep.subr.mxu0 0.0
        %1003 = vmatpush2.msra.mxu0 0.0
        %1004 = vmatprep.mubr.f32.mxu0 0.0
        %1005 = vmatmul.mubr.f32.gmra.mxu0 %v931
        %v1006 = vpop.f32.mrf.mxu0
        %v1007 = vadd.f32 %v928, %v1006
        %v1008 = vpop.f32.mrf.mxu0
        %1009 = vmatprep.mubr.f32.mxu0 0.0
        %1010 = vmatmul.mubr.f32.gmra.mxu0 %v934
        %v1011 = vpop.f32.mrf.mxu0
        %v1012 = vadd.f32 %v929, %v1011
        %v1013 = vpop.f32.mrf.mxu0
        %1014 = vdwg.mxu0
        %v1015 = vsub.f32 0.0, %v1007
        %v1016 = vsub.f32 0.0, %v1012
        %v1017 = vmul.f32 %v1015, 1.442695
        %v1018 = vpow.pop %v1017
        %v1019 = vmul.f32 %v1016, 1.442695
        %v1020 = vpow.pop %v1019
        %v1021 = vadd.f32 %v1018, 1.0
        %v1022 = vadd.f32 %v1020, 1.0
        %v1023 = vrcp.pop %v1021
        %v1024 = vmul.f32 1.0, %v1023
        %v1025 = vrcp.pop %v1022
        %v1026 = vmul.f32 1.0, %v1025
        %v1027 = vadd.f32 %v468, %v838
        %v1028 = vadd.f32 %v469, %v839
        %1030 = vset.pattern.permute.xlu0 0
        %1031 = vperm.xlu0 %1030, %v1024
        %v1032 = vpop.permute.xlu0 %1031
        %1035 = vset.pattern.permute.xlu0 0
        %1036 = vperm.xlu0 %1035, %v1026
        %v1037 = vpop.permute.xlu0 %1036
        %v1039 = vadd.f32 %v1027, %v1032
        %v1040 = vadd.f32 %v1028, %v1037
        %1041 = vst [vmem:[%s437] sm:$0xff] %v1039
        %1042 = vst [vmem:[%s437 + $0x8] sm:$0xff] %v1040
        %s1043 = sand.u32 %s270, 1
        %s1044 = scalar_lea.sflag [#allocation3], %s1043
        %s1045 = sand.u32 %s270, 1
        %s1046 = smul.addr %s1045, 16
        %s1047 = scalar_lea.vmem [#allocation6], %s1046
        // Predicated region
        $region107: #{tpu_custom_call.1} parent=97 // pred_check
          %p1048 = pneg %p280
        $region108: #{tpu_custom_call.1} parent=97 // pred_check_branch
          %1050 = sbr.rel (%p1048) target = $region110
        $region109: #{tpu_custom_call.1} parent=97 // pred_region
          %s1052 = ssub.s32 256, 256
          %1053 = vsyncadd %s1044, %s1052
          %s1054 = smul.addr %s26, 128
          %s1055 = scalar_lea.hbm %s11, %s1054
          %s1056 = sshll.u32 %s1047, 4
          %s1057 = int_to_ptr.vmem [resolvable:$true] %s1056
          %1062 = dma.vmem_to_hbm [thread:$0]  %s1057, 256, %s1055, %s1044, 128, 256, 8
        $region110: #{tpu_custom_call.1} parent=97 // pred_fallthru
          _
      $region98: #{tpu_custom_call.1} parent=5 // pred_fallthru
        _
      %p1063 = scmp.le.s32.totalorder 2, %s21
      // Predicated region
      $region111: #{tpu_custom_call.1} parent=5 // pred_check
        %p1064 = pneg %p1063
      $region112: #{tpu_custom_call.1} parent=5 // pred_check_branch
        %1066 = sbr.rel (%p1064) target = $region114
      $region113: #{tpu_custom_call.1} parent=5 // pred_region
        %s1067 = ssub.s32 %s21, 2
        // Predicated region
        $region115: #{tpu_custom_call.1} parent=113 // pred_check
          %p1068 = pneg %p286
        $region116: #{tpu_custom_call.1} parent=113 // pred_check_branch
          %1070 = sbr.rel (%p1068) target = $region118
        $region117: #{tpu_custom_call.1} parent=113 // pred_region
          %s1071 = sand.u32 %s271, 1
          %s1072 = scalar_lea.sflag [#allocation3], %s1071
          %s1073 = sand.u32 %s271, 1
          %s1074 = smul.addr %s1073, 16
          %s1075 = scalar_lea.vmem [#allocation6], %s1074
          %1076 = dma.done %s1072, 256
        $region118: #{tpu_custom_call.1} parent=113 // pred_fallthru
          _
      $region114: #{tpu_custom_call.1} parent=5 // pred_fallthru
        _
    $region6: #{tpu_custom_call.1} parent=1 // loop_footer
      %s25 = sadd.s32 1, %s21
    $region7: #{tpu_custom_call.1} parent=1 // loop_footer_branch
      %20 = sbr.rel target = $region3
    $region8: #{tpu_custom_call.1} parent=1 // loop_exit
      _
    %1077 = vsyncpa [#allocation3], 1
    %s1078 = scalar_lea.sflag [#allocation3], 1
    %1079 = vsyncpa %s1078, 1
    %1080 = vsyncpa [#allocation4], 1
    %s1081 = scalar_lea.sflag [#allocation4], 1
    %1082 = vsyncpa %s1081, 1

</llo_original>
